<compile_context>
chip_gen: v7x
topology: tpu7x:2x2x1
jax: 0.10.0
libtpu: 0.0.40
codegen_flags: <defaults>
</compile_context>

<pallas_src>
import functools
import numpy as np
import jax
import jax.numpy as jnp
from jax.experimental import pallas as pl
from jax.experimental.pallas import tpu as pltpu

NEG_SLOPE = 0.01  # torch.nn.LeakyReLU default
C1, C2 = 16, 32   # conv channel counts from the module


def _leaky(v):
    return jnp.where(v > 0, v, NEG_SLOPE * v)


def _predictor_kernel(TB, L4,
                      x_ref, w1_ref, b1_ref, w2_ref, b2_ref,
                      wfc1_ref, bfc1_ref, wfc2_ref, bfc2_ref,
                      out_ref, shiftA, shiftB):
    """One grid step = TB samples.

    Lane index m = t*TB + b  (t = pooled-twice position in [0, L4), b = sample).
    x_ref[0] has shape (4, TB*L4 + 2*TB): row r holds x[b, 4t + r], padded with
    TB zero lanes on both ends so "previous / next t" are plain static slices.
    """
    f32 = jnp.float32
    N4 = TB * L4

    xr = x_ref[0]                                   # (4, N4 + 2*TB)

    def row(r, off):                                # (1, N4) slice of stream r
        return xr[r:r + 1, off:off + N4]

    a0 = row(0, TB)        # x[b, 4t]
    a1 = row(1, TB)        # x[b, 4t+1]
    a2 = row(2, TB)        # x[b, 4t+2]
    a3 = row(3, TB)        # x[b, 4t+3]
    a3m = row(3, 0)        # x[b, 4t-1]   (zero pad at t == 0)
    a0p = row(0, 2 * TB)   # x[b, 4t+4]   (zero pad at t == L4-1)

    # ---- Conv1d(1, 16, k=3, pad=1) + LeakyReLU: broadcast VPU work ----
    w1k = [w1_ref[k] for k in range(3)]             # each (16, 1)
    b1c = b1_ref[...]                               # (16, 1)

    def conv1(left, mid, right):
        return _leaky(w1k[0] * left + w1k[1] * mid + w1k[2] * right + b1c)

    h1_0 = conv1(a3m, a0, a1)                       # h1 at l = 4t      (16, N4)
    h1_1 = conv1(a0, a1, a2)                        # h1 at l = 4t+1
    h1_2 = conv1(a1, a2, a3)                        # h1 at l = 4t+2
    h1_3 = conv1(a2, a3, a0p)                       # h1 at l = 4t+3

    # ---- MaxPool1d(2): elementwise max of parity streams ----
    p1_0 = jnp.maximum(h1_0, h1_1)                  # p1 at j = 2t      (16, N4)
    p1_1 = jnp.maximum(h1_2, h1_3)                  # p1 at j = 2t+1

    # ---- Shift p1 by one pooled position (= TB lanes) with zero padding,
    #      via small VMEM scratch buffers (static offset loads/stores only) ----
    shiftA[:, pl.ds(0, TB)] = jnp.zeros((C1, TB), f32)
    shiftA[:, pl.ds(TB, N4)] = p1_1
    p1_1m = shiftA[:, pl.ds(0, N4)]                 # p1 at j = 2t-1

    shiftB[:, pl.ds(TB + N4, TB)] = jnp.zeros((C1, TB), f32)
    shiftB[:, pl.ds(TB, N4)] = p1_0
    p1_0p = shiftB[:, pl.ds(2 * TB, N4)]            # p1 at j = 2t+2

    # ---- Conv1d(16, 32, k=3, pad=1) + LeakyReLU: one MXU matmul per tap ----
    def mm(a, b):
        return jnp.dot(a, b, preferred_element_type=f32)

    w2k = [w2_ref[k] for k in range(3)]             # each (32, 16)
    b2c = b2_ref[...]                               # (32, 1)

    h2_0 = _leaky(mm(w2k[0], p1_1m) + mm(w2k[1], p1_0) + mm(w2k[2], p1_1) + b2c)
    h2_1 = _leaky(mm(w2k[0], p1_0) + mm(w2k[1], p1_1) + mm(w2k[2], p1_0p) + b2c)

    # ---- MaxPool1d(2) ----
    p2 = jnp.maximum(h2_0, h2_1)                    # (32, N4); p2[c, t*TB+b] = torch p2[b,c,t]

    # ---- Linear(32*L4, H): accumulate (H,32)@(32,TB) over pooled positions t.
    #      torch's channel-major flatten is folded into the host-side weight layout.
    acc = mm(wfc1_ref[0], p2[:, 0:TB])
    for t in range(1, L4):
        acc = acc + mm(wfc1_ref[t], p2[:, t * TB:(t + 1) * TB])
    fc1 = _leaky(acc + bfc1_ref[...])               # (H, TB)

    # ---- Linear(H, label_dim), output kept transposed (lane-dense store) ----
    out = mm(wfc2_ref[...], fc1) + bfc2_ref[...]    # (label, TB)
    out_ref[...] = out.astype(out_ref.dtype)


def predictor_forward(x, params, hidden_dim, label_dim):
    w1, b1, w2, b2, wfc1, bfc1, wfc2, bfc2 = params
    f32 = jnp.float32
    B, D = x.shape
    assert D % 4 == 0 and D >= 4, "data_dim must be a multiple of 4 (MaxPool1d(2) x2)"
    L4 = D // 4
    H, Y = hidden_dim, label_dim

    # ---- batch tiling: TB samples per grid step ----
    def rup(a, m):
        return (a + m - 1) // m * m

    if B <= 128:
        TB = rup(B, 8)
        B_pad = TB
    else:
        TB = 128
        B_pad = rup(B, 128)
    G = B_pad // TB
    N4 = TB * L4

    # ---- host-side layout plumbing (pure reshapes/pads/transposes) ----
    xp = jnp.zeros((B_pad, D), f32).at[:B].set(x.astype(f32))
    # de-interleave by (l mod 4), flatten (t, b) t-major, pad TB zero lanes each side
    xr = xp.reshape(G, TB, L4, 4).transpose(0, 3, 2, 1).reshape(G, 4, N4)
    xr = jnp.pad(xr, ((0, 0), (0, 0), (TB, TB)))

    w1r = jnp.transpose(w1.astype(f32), (2, 0, 1))                 # (3, 16, 1)
    b1r = b1.astype(f32).reshape(C1, 1)
    w2r = jnp.transpose(w2.astype(f32), (2, 0, 1))                 # (3, 32, 16)
    b2r = b2.astype(f32).reshape(C2, 1)
    # torch flatten order: flat index = c*L4 + t  ->  weight stack (L4, H, 32)
    wfc1r = wfc1.astype(f32).reshape(H, C2, L4).transpose(2, 0, 1)  # (L4, H, 32)
    bfc1r = bfc1.astype(f32).reshape(H, 1)
    wfc2r = wfc2.astype(f32)                                        # (Y, H)
    bfc2r = bfc2.astype(f32).reshape(Y, 1)

    kernel = functools.partial(_predictor_kernel, TB, L4)

    def const_spec(shape):
        return pl.BlockSpec(shape, lambda g, n=len(shape): (0,) * n)

    out = pl.pallas_call(
        kernel,
        out_shape=jax.ShapeDtypeStruct((Y, B_pad), f32),
        grid=(G,),
        in_specs=[
            pl.BlockSpec((1, 4, N4 + 2 * TB), lambda g: (g, 0, 0)),  # x (per batch tile)
            const_spec((3, C1, 1)),      # conv1 weight
            const_spec((C1, 1)),         # conv1 bias
            const_spec((3, C2, C1)),     # conv2 weight
            const_spec((C2, 1)),         # conv2 bias
            const_spec((L4, H, C2)),     # fc1 weight (flatten folded in)
            const_spec((H, 1)),          # fc1 bias
            const_spec((Y, H)),          # fc2 weight
            const_spec((Y, 1)),          # fc2 bias
        ],
        out_specs=pl.BlockSpec((Y, TB), lambda g: (0, g)),
        scratch_shapes=[
            pltpu.VMEM((C1, N4 + 2 * TB), f32),
            pltpu.VMEM((C1, N4 + 2 * TB), f32),
        ],
        compiler_params=pltpu.CompilerParams(
            dimension_semantics=("parallel",)),
    )(xr, w1r, b1r, w2r, b2r, wfc1r, bfc1r, wfc2r, bfc2r)

    return out[:, :B].T                                             # (B, label_dim)


def reference_forward(x, params):
    """Pure numpy (float64) reference mirroring the PyTorch forward."""
    w1, b1, w2, b2, wfc1, bfc1, wfc2, bfc2 = [np.asarray(p, np.float64) for p in params]
    x = np.asarray(x, np.float64)
    B, D = x.shape

    def leaky(v):
        return np.where(v > 0, v, NEG_SLOPE * v)

    xp = np.pad(x, ((0, 0), (1, 1)))
    taps = np.stack([xp[:, k:k + D] for k in range(3)], axis=-1)          # (B, D, 3)
    h1 = np.einsum('bdk,ck->bcd', taps, w1[:, 0, :]) + b1[None, :, None]
    h1 = leaky(h1)
    p1 = h1.reshape(B, 16, D // 2, 2).max(-1)
    pp = np.pad(p1, ((0, 0), (0, 0), (1, 1)))
    taps2 = np.stack([pp[:, :, k:k + D // 2] for k in range(3)], axis=-1)  # (B,16,L2,3)
    h2 = np.einsum('bilk,oik->bol', taps2, w2) + b2[None, :, None]
    h2 = leaky(h2)
    p2 = h2.reshape(B, 32, D // 4, 2).max(-1)
    flat = p2.reshape(B, -1)
    fc1 = leaky(flat @ wfc1.T + bfc1)
    return fc1 @ wfc2.T + bfc2


if __name__ == "__main__":
    B, data_dim, hidden_dim, label_dim = 2, 16, 32, 4
    key = jax.random.PRNGKey(0)
    ks = jax.random.split(key, 9)
    f32 = jnp.float32

    x = jax.random.normal(ks[0], (B, data_dim), f32)
    w1 = 0.1 * jax.random.normal(ks[1], (16, 1, 3), f32)
    b1 = 0.1 * jax.random.normal(ks[2], (16,), f32)
    w2 = 0.1 * jax.random.normal(ks[3], (32, 16, 3), f32)
    b2 = 0.1 * jax.random.normal(ks[4], (32,), f32)
    wfc1 = 0.1 * jax.random.normal(ks[5], (hidden_dim, 32 * (data_dim // 4)), f32)
    bfc1 = 0.1 * jax.random.normal(ks[6], (hidden_dim,), f32)
    wfc2 = 0.1 * jax.random.normal(ks[7], (label_dim, hidden_dim), f32)
    bfc2 = 0.1 * jax.random.normal(ks[8], (label_dim,), f32)
    params = (w1, b1, w2, b2, wfc1, bfc1, wfc2, bfc2)

    out = predictor_forward(x, params, hidden_dim, label_dim)
    out = jax.block_until_ready(out)

    ref = reference_forward(np.asarray(x), [np.asarray(p) for p in params])
    assert out.shape == (B, label_dim)
    assert np.allclose(np.asarray(out), ref, rtol=5e-2, atol=5e-3), (np.asarray(out), ref)
    print("KERNEL_OK")
</pallas_src>

<mosaic_0001>
module attributes {stable_mosaic.version = 11 : i64} {
  func.func @_predictor_kernel(%arg0: i32, %arg1: memref<1x4x48xf32, #tpu.memory_space<vmem>>, %arg2: memref<3x16x1xf32, #tpu.memory_space<vmem>>, %arg3: memref<16x1xf32, #tpu.memory_space<vmem>>, %arg4: memref<3x32x16xf32, #tpu.memory_space<vmem>>, %arg5: memref<32x1xf32, #tpu.memory_space<vmem>>, %arg6: memref<4x32x32xf32, #tpu.memory_space<vmem>>, %arg7: memref<32x1xf32, #tpu.memory_space<vmem>>, %arg8: memref<4x32xf32, #tpu.memory_space<vmem>>, %arg9: memref<4x1xf32, #tpu.memory_space<vmem>>, %arg10: memref<4x8xf32, #tpu.memory_space<vmem>>, %arg11: memref<16x48xf32, #tpu.memory_space<vmem>>, %arg12: memref<16x48xf32, #tpu.memory_space<vmem>>) attributes {dimension_semantics = [#tpu.dimension_semantics<parallel>], iteration_bounds = array<i64: 1>, scalar_prefetch = 0 : i64, scratch_operands = 2 : i64, tpu.core_type = #tpu.core_type<tc>, window_params = [{transform_indices = @transform_0, window_bounds = array<i64: 1, 4, 48>}, {pipeline_mode = #tpu.pipeline_mode<synchronous>, transform_indices = @transform_1, window_bounds = array<i64: 3, 16, 1>}, {pipeline_mode = #tpu.pipeline_mode<synchronous>, transform_indices = @transform_2, window_bounds = array<i64: 16, 1>}, {pipeline_mode = #tpu.pipeline_mode<synchronous>, transform_indices = @transform_3, window_bounds = array<i64: 3, 32, 16>}, {pipeline_mode = #tpu.pipeline_mode<synchronous>, transform_indices = @transform_4, window_bounds = array<i64: 32, 1>}, {pipeline_mode = #tpu.pipeline_mode<synchronous>, transform_indices = @transform_5, window_bounds = array<i64: 4, 32, 32>}, {pipeline_mode = #tpu.pipeline_mode<synchronous>, transform_indices = @transform_6, window_bounds = array<i64: 32, 1>}, {pipeline_mode = #tpu.pipeline_mode<synchronous>, transform_indices = @transform_7, window_bounds = array<i64: 4, 32>}, {pipeline_mode = #tpu.pipeline_mode<synchronous>, transform_indices = @transform_8, window_bounds = array<i64: 4, 1>}, {transform_indices = @transform_9, window_bounds = array<i64: 4, 8>}]} {
    %c0 = arith.constant 0 : index
    %c0_0 = arith.constant 0 : index
    %c0_1 = arith.constant 0 : index
    %0 = vector.load %arg1[%c0, %c0_0, %c0_1] : memref<1x4x48xf32, #tpu.memory_space<vmem>>, vector<1x4x48xf32>
    %1 = vector.shape_cast %0 : vector<1x4x48xf32> to vector<4x48xf32>
    %2 = vector.extract_strided_slice %1 {offsets = [0, 8], sizes = [1, 32], strides = [1, 1]} : vector<4x48xf32> to vector<1x32xf32>
    %3 = vector.extract_strided_slice %1 {offsets = [1, 8], sizes = [1, 32], strides = [1, 1]} : vector<4x48xf32> to vector<1x32xf32>
    %4 = vector.extract_strided_slice %1 {offsets = [2, 8], sizes = [1, 32], strides = [1, 1]} : vector<4x48xf32> to vector<1x32xf32>
    %5 = vector.extract_strided_slice %1 {offsets = [3, 8], sizes = [1, 32], strides = [1, 1]} : vector<4x48xf32> to vector<1x32xf32>
    %6 = vector.extract_strided_slice %1 {offsets = [3, 0], sizes = [1, 32], strides = [1, 1]} : vector<4x48xf32> to vector<1x32xf32>
    %7 = vector.extract_strided_slice %1 {offsets = [0, 16], sizes = [1, 32], strides = [1, 1]} : vector<4x48xf32> to vector<1x32xf32>
    %c0_2 = arith.constant 0 : index
    %c0_3 = arith.constant 0 : index
    %c0_4 = arith.constant 0 : index
    %8 = vector.load %arg2[%c0_2, %c0_3, %c0_4] : memref<3x16x1xf32, #tpu.memory_space<vmem>>, vector<1x16x1xf32>
    %9 = vector.shape_cast %8 : vector<1x16x1xf32> to vector<16x1xf32>
    %c1 = arith.constant 1 : index
    %c0_5 = arith.constant 0 : index
    %c0_6 = arith.constant 0 : index
    %10 = vector.load %arg2[%c1, %c0_5, %c0_6] : memref<3x16x1xf32, #tpu.memory_space<vmem>>, vector<1x16x1xf32>
    %11 = vector.shape_cast %10 : vector<1x16x1xf32> to vector<16x1xf32>
    %c2 = arith.constant 2 : index
    %c0_7 = arith.constant 0 : index
    %c0_8 = arith.constant 0 : index
    %12 = vector.load %arg2[%c2, %c0_7, %c0_8] : memref<3x16x1xf32, #tpu.memory_space<vmem>>, vector<1x16x1xf32>
    %13 = vector.shape_cast %12 : vector<1x16x1xf32> to vector<16x1xf32>
    %c0_9 = arith.constant 0 : index
    %c0_10 = arith.constant 0 : index
    %14 = vector.load %arg3[%c0_9, %c0_10] : memref<16x1xf32, #tpu.memory_space<vmem>>, vector<16x1xf32>
    %15 = vector.broadcast %9 : vector<16x1xf32> to vector<16x32xf32>
    %16 = vector.broadcast %6 : vector<1x32xf32> to vector<16x32xf32>
    %17 = arith.mulf %15, %16 : vector<16x32xf32>
    %18 = vector.broadcast %11 : vector<16x1xf32> to vector<16x32xf32>
    %19 = vector.broadcast %2 : vector<1x32xf32> to vector<16x32xf32>
    %20 = arith.mulf %18, %19 : vector<16x32xf32>
    %21 = arith.addf %17, %20 : vector<16x32xf32>
    %22 = vector.broadcast %13 : vector<16x1xf32> to vector<16x32xf32>
    %23 = vector.broadcast %3 : vector<1x32xf32> to vector<16x32xf32>
    %24 = arith.mulf %22, %23 : vector<16x32xf32>
    %25 = arith.addf %21, %24 : vector<16x32xf32>
    %26 = vector.broadcast %14 : vector<16x1xf32> to vector<16x32xf32>
    %27 = arith.addf %25, %26 : vector<16x32xf32>
    %cst = arith.constant 0.000000e+00 : f32
    %28 = vector.broadcast %cst : f32 to vector<16x32xf32>
    %29 = arith.cmpf ogt, %27, %28 : vector<16x32xf32>
    %cst_11 = arith.constant 0.00999999977 : f32
    %30 = vector.broadcast %cst_11 : f32 to vector<16x32xf32>
    %31 = arith.mulf %30, %27 : vector<16x32xf32>
    %32 = arith.select %29, %27, %31 : vector<16x32xi1>, vector<16x32xf32>
    %33 = vector.broadcast %9 : vector<16x1xf32> to vector<16x32xf32>
    %34 = vector.broadcast %2 : vector<1x32xf32> to vector<16x32xf32>
    %35 = arith.mulf %33, %34 : vector<16x32xf32>
    %36 = vector.broadcast %11 : vector<16x1xf32> to vector<16x32xf32>
    %37 = vector.broadcast %3 : vector<1x32xf32> to vector<16x32xf32>
    %38 = arith.mulf %36, %37 : vector<16x32xf32>
    %39 = arith.addf %35, %38 : vector<16x32xf32>
    %40 = vector.broadcast %13 : vector<16x1xf32> to vector<16x32xf32>
    %41 = vector.broadcast %4 : vector<1x32xf32> to vector<16x32xf32>
    %42 = arith.mulf %40, %41 : vector<16x32xf32>
    %43 = arith.addf %39, %42 : vector<16x32xf32>
    %44 = vector.broadcast %14 : vector<16x1xf32> to vector<16x32xf32>
    %45 = arith.addf %43, %44 : vector<16x32xf32>
    %cst_12 = arith.constant 0.000000e+00 : f32
    %46 = vector.broadcast %cst_12 : f32 to vector<16x32xf32>
    %47 = arith.cmpf ogt, %45, %46 : vector<16x32xf32>
    %cst_13 = arith.constant 0.00999999977 : f32
    %48 = vector.broadcast %cst_13 : f32 to vector<16x32xf32>
    %49 = arith.mulf %48, %45 : vector<16x32xf32>
    %50 = arith.select %47, %45, %49 : vector<16x32xi1>, vector<16x32xf32>
    %51 = vector.broadcast %9 : vector<16x1xf32> to vector<16x32xf32>
    %52 = vector.broadcast %3 : vector<1x32xf32> to vector<16x32xf32>
    %53 = arith.mulf %51, %52 : vector<16x32xf32>
    %54 = vector.broadcast %11 : vector<16x1xf32> to vector<16x32xf32>
    %55 = vector.broadcast %4 : vector<1x32xf32> to vector<16x32xf32>
    %56 = arith.mulf %54, %55 : vector<16x32xf32>
    %57 = arith.addf %53, %56 : vector<16x32xf32>
    %58 = vector.broadcast %13 : vector<16x1xf32> to vector<16x32xf32>
    %59 = vector.broadcast %5 : vector<1x32xf32> to vector<16x32xf32>
    %60 = arith.mulf %58, %59 : vector<16x32xf32>
    %61 = arith.addf %57, %60 : vector<16x32xf32>
    %62 = vector.broadcast %14 : vector<16x1xf32> to vector<16x32xf32>
    %63 = arith.addf %61, %62 : vector<16x32xf32>
    %cst_14 = arith.constant 0.000000e+00 : f32
    %64 = vector.broadcast %cst_14 : f32 to vector<16x32xf32>
    %65 = arith.cmpf ogt, %63, %64 : vector<16x32xf32>
    %cst_15 = arith.constant 0.00999999977 : f32
    %66 = vector.broadcast %cst_15 : f32 to vector<16x32xf32>
    %67 = arith.mulf %66, %63 : vector<16x32xf32>
    %68 = arith.select %65, %63, %67 : vector<16x32xi1>, vector<16x32xf32>
    %69 = vector.broadcast %9 : vector<16x1xf32> to vector<16x32xf32>
    %70 = vector.broadcast %4 : vector<1x32xf32> to vector<16x32xf32>
    %71 = arith.mulf %69, %70 : vector<16x32xf32>
    %72 = vector.broadcast %11 : vector<16x1xf32> to vector<16x32xf32>
    %73 = vector.broadcast %5 : vector<1x32xf32> to vector<16x32xf32>
    %74 = arith.mulf %72, %73 : vector<16x32xf32>
    %75 = arith.addf %71, %74 : vector<16x32xf32>
    %76 = vector.broadcast %13 : vector<16x1xf32> to vector<16x32xf32>
    %77 = vector.broadcast %7 : vector<1x32xf32> to vector<16x32xf32>
    %78 = arith.mulf %76, %77 : vector<16x32xf32>
    %79 = arith.addf %75, %78 : vector<16x32xf32>
    %80 = vector.broadcast %14 : vector<16x1xf32> to vector<16x32xf32>
    %81 = arith.addf %79, %80 : vector<16x32xf32>
    %cst_16 = arith.constant 0.000000e+00 : f32
    %82 = vector.broadcast %cst_16 : f32 to vector<16x32xf32>
    %83 = arith.cmpf ogt, %81, %82 : vector<16x32xf32>
    %cst_17 = arith.constant 0.00999999977 : f32
    %84 = vector.broadcast %cst_17 : f32 to vector<16x32xf32>
    %85 = arith.mulf %84, %81 : vector<16x32xf32>
    %86 = arith.select %83, %81, %85 : vector<16x32xi1>, vector<16x32xf32>
    %87 = arith.maximumf %32, %50 : vector<16x32xf32>
    %88 = arith.maximumf %68, %86 : vector<16x32xf32>
    %cst_18 = arith.constant 0.000000e+00 : f32
    %89 = vector.broadcast %cst_18 : f32 to vector<16x8xf32>
    %c0_19 = arith.constant 0 : index
    %c0_20 = arith.constant 0 : index
    %90 = vector.load %arg11[%c0_19, %c0_20] : memref<16x48xf32, #tpu.memory_space<vmem>>, vector<16x8xf32>
    tpu.vector_store %arg11[%c0_19, %c0_20], %89 {strides = array<i32>} : memref<16x48xf32, #tpu.memory_space<vmem>>, vector<16x8xf32>,
    %c0_21 = arith.constant 0 : index
    %c8 = arith.constant 8 : index
    %91 = vector.load %arg11[%c0_21, %c8] : memref<16x48xf32, #tpu.memory_space<vmem>>, vector<16x32xf32>
    tpu.vector_store %arg11[%c0_21, %c8], %88 {strides = array<i32>} : memref<16x48xf32, #tpu.memory_space<vmem>>, vector<16x32xf32>,
    %c0_22 = arith.constant 0 : index
    %c0_23 = arith.constant 0 : index
    %92 = vector.load %arg11[%c0_22, %c0_23] : memref<16x48xf32, #tpu.memory_space<vmem>>, vector<16x32xf32>
    %cst_24 = arith.constant 0.000000e+00 : f32
    %93 = vector.broadcast %cst_24 : f32 to vector<16x8xf32>
    %c0_25 = arith.constant 0 : index
    %c40 = arith.constant 40 : index
    %94 = vector.load %arg12[%c0_25, %c40] : memref<16x48xf32, #tpu.memory_space<vmem>>, vector<16x8xf32>
    tpu.vector_store %arg12[%c0_25, %c40], %93 {strides = array<i32>} : memref<16x48xf32, #tpu.memory_space<vmem>>, vector<16x8xf32>,
    %c0_26 = arith.constant 0 : index
    %c8_27 = arith.constant 8 : index
    %95 = vector.load %arg12[%c0_26, %c8_27] : memref<16x48xf32, #tpu.memory_space<vmem>>, vector<16x32xf32>
    tpu.vector_store %arg12[%c0_26, %c8_27], %87 {strides = array<i32>} : memref<16x48xf32, #tpu.memory_space<vmem>>, vector<16x32xf32>,
    %c0_28 = arith.constant 0 : index
    %c16 = arith.constant 16 : index
    %96 = vector.load %arg12[%c0_28, %c16] : memref<16x48xf32, #tpu.memory_space<vmem>>, vector<16x32xf32>
    %c0_29 = arith.constant 0 : index
    %c0_30 = arith.constant 0 : index
    %c0_31 = arith.constant 0 : index
    %97 = vector.load %arg4[%c0_29, %c0_30, %c0_31] : memref<3x32x16xf32, #tpu.memory_space<vmem>>, vector<1x32x16xf32>
    %98 = vector.shape_cast %97 : vector<1x32x16xf32> to vector<32x16xf32>
    %c1_32 = arith.constant 1 : index
    %c0_33 = arith.constant 0 : index
    %c0_34 = arith.constant 0 : index
    %99 = vector.load %arg4[%c1_32, %c0_33, %c0_34] : memref<3x32x16xf32, #tpu.memory_space<vmem>>, vector<1x32x16xf32>
    %100 = vector.shape_cast %99 : vector<1x32x16xf32> to vector<32x16xf32>
    %c2_35 = arith.constant 2 : index
    %c0_36 = arith.constant 0 : index
    %c0_37 = arith.constant 0 : index
    %101 = vector.load %arg4[%c2_35, %c0_36, %c0_37] : memref<3x32x16xf32, #tpu.memory_space<vmem>>, vector<1x32x16xf32>
    %102 = vector.shape_cast %101 : vector<1x32x16xf32> to vector<32x16xf32>
    %c0_38 = arith.constant 0 : index
    %c0_39 = arith.constant 0 : index
    %103 = vector.load %arg5[%c0_38, %c0_39] : memref<32x1xf32, #tpu.memory_space<vmem>>, vector<32x1xf32>
    %cst_40 = arith.constant dense<0.000000e+00> : vector<32x32xf32>
    %104 = tpu.matmul %98, %92, %cst_40 {dimension_numbers = #tpu.dot_dimension_numbers<[1], [0], [0], [1], [0, 0, 1, 1], [], []>} : vector<32x16xf32>, vector<16x32xf32>, vector<32x32xf32> -> vector<32x32xf32>
    %cst_41 = arith.constant dense<0.000000e+00> : vector<32x32xf32>
    %105 = tpu.matmul %100, %87, %cst_41 {dimension_numbers = #tpu.dot_dimension_numbers<[1], [0], [0], [1], [0, 0, 1, 1], [], []>} : vector<32x16xf32>, vector<16x32xf32>, vector<32x32xf32> -> vector<32x32xf32>
    %106 = arith.addf %104, %105 : vector<32x32xf32>
    %cst_42 = arith.constant dense<0.000000e+00> : vector<32x32xf32>
    %107 = tpu.matmul %102, %88, %cst_42 {dimension_numbers = #tpu.dot_dimension_numbers<[1], [0], [0], [1], [0, 0, 1, 1], [], []>} : vector<32x16xf32>, vector<16x32xf32>, vector<32x32xf32> -> vector<32x32xf32>
    %108 = arith.addf %106, %107 : vector<32x32xf32>
    %109 = vector.broadcast %103 : vector<32x1xf32> to vector<32x32xf32>
    %110 = arith.addf %108, %109 : vector<32x32xf32>
    %cst_43 = arith.constant 0.000000e+00 : f32
    %111 = vector.broadcast %cst_43 : f32 to vector<32x32xf32>
    %112 = arith.cmpf ogt, %110, %111 : vector<32x32xf32>
    %cst_44 = arith.constant 0.00999999977 : f32
    %113 = vector.broadcast %cst_44 : f32 to vector<32x32xf32>
    %114 = arith.mulf %113, %110 : vector<32x32xf32>
    %115 = arith.select %112, %110, %114 : vector<32x32xi1>, vector<32x32xf32>
    %cst_45 = arith.constant dense<0.000000e+00> : vector<32x32xf32>
    %116 = tpu.matmul %98, %87, %cst_45 {dimension_numbers = #tpu.dot_dimension_numbers<[1], [0], [0], [1], [0, 0, 1, 1], [], []>} : vector<32x16xf32>, vector<16x32xf32>, vector<32x32xf32> -> vector<32x32xf32>
    %cst_46 = arith.constant dense<0.000000e+00> : vector<32x32xf32>
    %117 = tpu.matmul %100, %88, %cst_46 {dimension_numbers = #tpu.dot_dimension_numbers<[1], [0], [0], [1], [0, 0, 1, 1], [], []>} : vector<32x16xf32>, vector<16x32xf32>, vector<32x32xf32> -> vector<32x32xf32>
    %118 = arith.addf %116, %117 : vector<32x32xf32>
    %cst_47 = arith.constant dense<0.000000e+00> : vector<32x32xf32>
    %119 = tpu.matmul %102, %96, %cst_47 {dimension_numbers = #tpu.dot_dimension_numbers<[1], [0], [0], [1], [0, 0, 1, 1], [], []>} : vector<32x16xf32>, vector<16x32xf32>, vector<32x32xf32> -> vector<32x32xf32>
    %120 = arith.addf %118, %119 : vector<32x32xf32>
    %121 = vector.broadcast %103 : vector<32x1xf32> to vector<32x32xf32>
    %122 = arith.addf %120, %121 : vector<32x32xf32>
    %cst_48 = arith.constant 0.000000e+00 : f32
    %123 = vector.broadcast %cst_48 : f32 to vector<32x32xf32>
    %124 = arith.cmpf ogt, %122, %123 : vector<32x32xf32>
    %cst_49 = arith.constant 0.00999999977 : f32
    %125 = vector.broadcast %cst_49 : f32 to vector<32x32xf32>
    %126 = arith.mulf %125, %122 : vector<32x32xf32>
    %127 = arith.select %124, %122, %126 : vector<32x32xi1>, vector<32x32xf32>
    %128 = arith.maximumf %115, %127 : vector<32x32xf32>
    %c0_50 = arith.constant 0 : index
    %c0_51 = arith.constant 0 : index
    %c0_52 = arith.constant 0 : index
    %129 = vector.load %arg6[%c0_50, %c0_51, %c0_52] : memref<4x32x32xf32, #tpu.memory_space<vmem>>, vector<1x32x32xf32>
    %130 = vector.shape_cast %129 : vector<1x32x32xf32> to vector<32x32xf32>
    %131 = vector.extract_strided_slice %128 {offsets = [0, 0], sizes = [32, 8], strides = [1, 1]} : vector<32x32xf32> to vector<32x8xf32>
    %cst_53 = arith.constant dense<0.000000e+00> : vector<32x8xf32>
    %132 = tpu.matmul %130, %131, %cst_53 {dimension_numbers = #tpu.dot_dimension_numbers<[1], [0], [0], [1], [0, 0, 1, 1], [], []>} : vector<32x32xf32>, vector<32x8xf32>, vector<32x8xf32> -> vector<32x8xf32>
    %c1_54 = arith.constant 1 : index
    %c0_55 = arith.constant 0 : index
    %c0_56 = arith.constant 0 : index
    %133 = vector.load %arg6[%c1_54, %c0_55, %c0_56] : memref<4x32x32xf32, #tpu.memory_space<vmem>>, vector<1x32x32xf32>
    %134 = vector.shape_cast %133 : vector<1x32x32xf32> to vector<32x32xf32>
    %135 = vector.extract_strided_slice %128 {offsets = [0, 8], sizes = [32, 8], strides = [1, 1]} : vector<32x32xf32> to vector<32x8xf32>
    %cst_57 = arith.constant dense<0.000000e+00> : vector<32x8xf32>
    %136 = tpu.matmul %134, %135, %cst_57 {dimension_numbers = #tpu.dot_dimension_numbers<[1], [0], [0], [1], [0, 0, 1, 1], [], []>} : vector<32x32xf32>, vector<32x8xf32>, vector<32x8xf32> -> vector<32x8xf32>
    %137 = arith.addf %132, %136 : vector<32x8xf32>
    %c2_58 = arith.constant 2 : index
    %c0_59 = arith.constant 0 : index
    %c0_60 = arith.constant 0 : index
    %138 = vector.load %arg6[%c2_58, %c0_59, %c0_60] : memref<4x32x32xf32, #tpu.memory_space<vmem>>, vector<1x32x32xf32>
    %139 = vector.shape_cast %138 : vector<1x32x32xf32> to vector<32x32xf32>
    %140 = vector.extract_strided_slice %128 {offsets = [0, 16], sizes = [32, 8], strides = [1, 1]} : vector<32x32xf32> to vector<32x8xf32>
    %cst_61 = arith.constant dense<0.000000e+00> : vector<32x8xf32>
    %141 = tpu.matmul %139, %140, %cst_61 {dimension_numbers = #tpu.dot_dimension_numbers<[1], [0], [0], [1], [0, 0, 1, 1], [], []>} : vector<32x32xf32>, vector<32x8xf32>, vector<32x8xf32> -> vector<32x8xf32>
    %142 = arith.addf %137, %141 : vector<32x8xf32>
    %c3 = arith.constant 3 : index
    %c0_62 = arith.constant 0 : index
    %c0_63 = arith.constant 0 : index
    %143 = vector.load %arg6[%c3, %c0_62, %c0_63] : memref<4x32x32xf32, #tpu.memory_space<vmem>>, vector<1x32x32xf32>
    %144 = vector.shape_cast %143 : vector<1x32x32xf32> to vector<32x32xf32>
    %145 = vector.extract_strided_slice %128 {offsets = [0, 24], sizes = [32, 8], strides = [1, 1]} : vector<32x32xf32> to vector<32x8xf32>
    %cst_64 = arith.constant dense<0.000000e+00> : vector<32x8xf32>
    %146 = tpu.matmul %144, %145, %cst_64 {dimension_numbers = #tpu.dot_dimension_numbers<[1], [0], [0], [1], [0, 0, 1, 1], [], []>} : vector<32x32xf32>, vector<32x8xf32>, vector<32x8xf32> -> vector<32x8xf32>
    %147 = arith.addf %142, %146 : vector<32x8xf32>
    %c0_65 = arith.constant 0 : index
    %c0_66 = arith.constant 0 : index
    %148 = vector.load %arg7[%c0_65, %c0_66] : memref<32x1xf32, #tpu.memory_space<vmem>>, vector<32x1xf32>
    %149 = vector.broadcast %148 : vector<32x1xf32> to vector<32x8xf32>
    %150 = arith.addf %147, %149 : vector<32x8xf32>
    %cst_67 = arith.constant 0.000000e+00 : f32
    %151 = vector.broadcast %cst_67 : f32 to vector<32x8xf32>
    %152 = arith.cmpf ogt, %150, %151 : vector<32x8xf32>
    %cst_68 = arith.constant 0.00999999977 : f32
    %153 = vector.broadcast %cst_68 : f32 to vector<32x8xf32>
    %154 = arith.mulf %153, %150 : vector<32x8xf32>
    %155 = arith.select %152, %150, %154 : vector<32x8xi1>, vector<32x8xf32>
    %c0_69 = arith.constant 0 : index
    %c0_70 = arith.constant 0 : index
    %156 = vector.load %arg8[%c0_69, %c0_70] : memref<4x32xf32, #tpu.memory_space<vmem>>, vector<4x32xf32>
    %cst_71 = arith.constant dense<0.000000e+00> : vector<4x8xf32>
    %157 = tpu.matmul %156, %155, %cst_71 {dimension_numbers = #tpu.dot_dimension_numbers<[1], [0], [0], [1], [0, 0, 1, 1], [], []>} : vector<4x32xf32>, vector<32x8xf32>, vector<4x8xf32> -> vector<4x8xf32>
    %c0_72 = arith.constant 0 : index
    %c0_73 = arith.constant 0 : index
    %158 = vector.load %arg9[%c0_72, %c0_73] : memref<4x1xf32, #tpu.memory_space<vmem>>, vector<4x1xf32>
    %159 = vector.broadcast %158 : vector<4x1xf32> to vector<4x8xf32>
    %160 = arith.addf %157, %159 : vector<4x8xf32>
    %c0_74 = arith.constant 0 : index
    %c0_75 = arith.constant 0 : index
    %161 = vector.load %arg10[%c0_74, %c0_75] : memref<4x8xf32, #tpu.memory_space<vmem>>, vector<4x8xf32>
    tpu.vector_store %arg10[%c0_74, %c0_75], %160 {strides = array<i32>} : memref<4x8xf32, #tpu.memory_space<vmem>>, vector<4x8xf32>,
    return
  }
  func.func @transform_0(%arg0: i32) -> (i32, i32, i32) {
    %c0_i32 = arith.constant 0 : i32
    %c0_i32_0 = arith.constant 0 : i32
    %c0_i32_1 = arith.constant 0 : i32
    return %arg0, %c0_i32, %c0_i32_0 : i32, i32, i32
  }
  func.func @transform_1(%arg0: i32) -> (i32, i32, i32) {
    %c0_i32 = arith.constant 0 : i32
    %c0_i32_0 = arith.constant 0 : i32
    %c0_i32_1 = arith.constant 0 : i32
    %c0_i32_2 = arith.constant 0 : i32
    return %c0_i32, %c0_i32_0, %c0_i32_1 : i32, i32, i32
  }
  func.func @transform_2(%arg0: i32) -> (i32, i32) {
    %c0_i32 = arith.constant 0 : i32
    %c0_i32_0 = arith.constant 0 : i32
    %c0_i32_1 = arith.constant 0 : i32
    return %c0_i32, %c0_i32_0 : i32, i32
  }
  func.func @transform_3(%arg0: i32) -> (i32, i32, i32) {
    %c0_i32 = arith.constant 0 : i32
    %c0_i32_0 = arith.constant 0 : i32
    %c0_i32_1 = arith.constant 0 : i32
    %c0_i32_2 = arith.constant 0 : i32
    return %c0_i32, %c0_i32_0, %c0_i32_1 : i32, i32, i32
  }
  func.func @transform_4(%arg0: i32) -> (i32, i32) {
    %c0_i32 = arith.constant 0 : i32
    %c0_i32_0 = arith.constant 0 : i32
    %c0_i32_1 = arith.constant 0 : i32
    return %c0_i32, %c0_i32_0 : i32, i32
  }
  func.func @transform_5(%arg0: i32) -> (i32, i32, i32) {
    %c0_i32 = arith.constant 0 : i32
    %c0_i32_0 = arith.constant 0 : i32
    %c0_i32_1 = arith.constant 0 : i32
    %c0_i32_2 = arith.constant 0 : i32
    return %c0_i32, %c0_i32_0, %c0_i32_1 : i32, i32, i32
  }
  func.func @transform_6(%arg0: i32) -> (i32, i32) {
    %c0_i32 = arith.constant 0 : i32
    %c0_i32_0 = arith.constant 0 : i32
    %c0_i32_1 = arith.constant 0 : i32
    return %c0_i32, %c0_i32_0 : i32, i32
  }
  func.func @transform_7(%arg0: i32) -> (i32, i32) {
    %c0_i32 = arith.constant 0 : i32
    %c0_i32_0 = arith.constant 0 : i32
    %c0_i32_1 = arith.constant 0 : i32
    return %c0_i32, %c0_i32_0 : i32, i32
  }
  func.func @transform_8(%arg0: i32) -> (i32, i32) {
    %c0_i32 = arith.constant 0 : i32
    %c0_i32_0 = arith.constant 0 : i32
    %c0_i32_1 = arith.constant 0 : i32
    return %c0_i32, %c0_i32_0 : i32, i32
  }
  func.func @transform_9(%arg0: i32) -> (i32, i32) {
    %c0_i32 = arith.constant 0 : i32
    %c0_i32_0 = arith.constant 0 : i32
    return %c0_i32, %arg0 : i32, i32
  }
}

</mosaic_0001>

<llo_original>
// kernel: tpu_custom_call.1
$region0: #{tpu_custom_call.1}
  #allocation0 [shape = 'u32[]', space=smem, size = 0x4, offset = 0x4, fixed_abs, tag = 'smem constant byte address 0x4 - core index']
  #allocation1 [shape = 'u32[144,128]{1,0:T(1,128)}', space=vmem, size = 0x12000, scoped, tag = 'internal scratch']
  #allocation2 [shape = 'f32[16,48]{1,0:T(8,128)}', space=vmem, size = 0x2000, scoped, tag = 'scratch operand']
  #allocation3 [shape = 'f32[16,48]{1,0:T(8,128)}', space=vmem, size = 0x2000, scoped, tag = 'scratch operand']
  %s0 = inlined_call_operand.vmem [shape: f32[1,4,48], index: 0, kind: input, shape index: {}]
  %s1 = inlined_call_operand.vmem [shape: f32[3,16,1], index: 1, kind: input, shape index: {}]
  %s2 = inlined_call_operand.vmem [shape: f32[16,1], index: 2, kind: input, shape index: {}]
  %s3 = inlined_call_operand.vmem [shape: f32[3,32,16], index: 3, kind: input, shape index: {}]
  %s4 = inlined_call_operand.vmem [shape: f32[32,1], index: 4, kind: input, shape index: {}]
  %s5 = inlined_call_operand.vmem [shape: f32[4,32,32], index: 5, kind: input, shape index: {}]
  %s6 = inlined_call_operand.vmem [shape: f32[32,1], index: 6, kind: input, shape index: {}]
  %s7 = inlined_call_operand.vmem [shape: f32[4,32], index: 7, kind: input, shape index: {}]
  %s8 = inlined_call_operand.vmem [shape: f32[4,1], index: 8, kind: input, shape index: {}]
  %s9 = inlined_call_operand.hbm [shape: f32[4,8], index: 9, kind: output, shape index: {}]
  %s10 = sld [smem:[#allocation0]]
  $region46: #{tpu_custom_call.1} parent=0
    _
  %s12 = ssub.s32 1, %s10
  %s13 = scalar_select 0, %s12, %s10
  $region1: #{tpu_custom_call.1} parent=0
    #allocation4 [shape = 'u8[2048]{0}', space=vmem, size = 0x800, scoped, tag = 'output window, operand 0, single buffered']
    #allocation5 [shape = 's32[1]{0}', space=sflag, size = 0x4, scoped, tag = 'scoped memory for tpu_custom_call.1']
    %14 = vsyncpa [#allocation5], 0
    // Predicated region
    $region2: #{tpu_custom_call.1} parent=1 // pred_check
      _
    $region3: #{tpu_custom_call.1} parent=1 // pred_check_branch
      %16 = sbr.rel (0) target = $region5
    $region4: #{tpu_custom_call.1} parent=1 // pred_region
      _
    $region5: #{tpu_custom_call.1} parent=1 // pred_fallthru
      _
    // Predicated region
    $region6: #{tpu_custom_call.1} parent=1 // pred_check
      _
    $region7: #{tpu_custom_call.1} parent=1 // pred_check_branch
      %18 = sbr.rel (0) target = $region9
    $region8: #{tpu_custom_call.1} parent=1 // pred_region
      _
    $region9: #{tpu_custom_call.1} parent=1 // pred_fallthru
      _
    // Predicated region
    $region10: #{tpu_custom_call.1} parent=1 // pred_check
      _
    $region11: #{tpu_custom_call.1} parent=1 // pred_check_branch
      %20 = sbr.rel (0) target = $region13
    $region12: #{tpu_custom_call.1} parent=1 // pred_region
      _
    $region13: #{tpu_custom_call.1} parent=1 // pred_fallthru
      _
    // Predicated region
    $region14: #{tpu_custom_call.1} parent=1 // pred_check
      _
    $region15: #{tpu_custom_call.1} parent=1 // pred_check_branch
      %22 = sbr.rel (0) target = $region17
    $region16: #{tpu_custom_call.1} parent=1 // pred_region
      _
    $region17: #{tpu_custom_call.1} parent=1 // pred_fallthru
      _
    // Predicated region
    $region18: #{tpu_custom_call.1} parent=1 // pred_check
      _
    $region19: #{tpu_custom_call.1} parent=1 // pred_check_branch
      %24 = sbr.rel (0) target = $region21
    $region20: #{tpu_custom_call.1} parent=1 // pred_region
      _
    $region21: #{tpu_custom_call.1} parent=1 // pred_fallthru
      _
    // Predicated region
    $region22: #{tpu_custom_call.1} parent=1 // pred_check
      _
    $region23: #{tpu_custom_call.1} parent=1 // pred_check_branch
      %26 = sbr.rel (0) target = $region25
    $region24: #{tpu_custom_call.1} parent=1 // pred_region
      _
    $region25: #{tpu_custom_call.1} parent=1 // pred_fallthru
      _
    // Predicated region
    $region26: #{tpu_custom_call.1} parent=1 // pred_check
      _
    $region27: #{tpu_custom_call.1} parent=1 // pred_check_branch
      %28 = sbr.rel (0) target = $region29
    $region28: #{tpu_custom_call.1} parent=1 // pred_region
      _
    $region29: #{tpu_custom_call.1} parent=1 // pred_fallthru
      _
    // Predicated region
    $region30: #{tpu_custom_call.1} parent=1 // pred_check
      _
    $region31: #{tpu_custom_call.1} parent=1 // pred_check_branch
      %30 = sbr.rel (0) target = $region33
    $region32: #{tpu_custom_call.1} parent=1 // pred_region
      _
    $region33: #{tpu_custom_call.1} parent=1 // pred_fallthru
      _
    // Predicated region
    $region34: #{tpu_custom_call.1} parent=1 // pred_check
      _
    $region35: #{tpu_custom_call.1} parent=1 // pred_check_branch
      %32 = sbr.rel (0) target = $region37
    $region36: #{tpu_custom_call.1} parent=1 // pred_region
      _
    $region37: #{tpu_custom_call.1} parent=1 // pred_fallthru
      _
    %v33 = vld [vmem:[%s0] sm:$0xf]
    %v34 = vld [vmem:[%s1] sm:$0xff]
    %v35 = vld [vmem:[%s1 + $0x8] sm:$0xff]
    %s36 = scalar_lea.vmem %s1, 16
    %v37 = vld [vmem:[%s36] sm:$0xff]
    %v38 = vld [vmem:[%s36 + $0x8] sm:$0xff]
    %s39 = scalar_lea.vmem %s1, 32
    %v40 = vld [vmem:[%s39] sm:$0xff]
    %v41 = vld [vmem:[%s39 + $0x8] sm:$0xff]
    %v42 = vld [vmem:[%s2] sm:$0xff]
    %v43 = vld [vmem:[%s2 + $0x8] sm:$0xff]
    %45 = vset.pattern.permute.xlu0 0
    %46 = vperm.xlu0 %45, %v34
    %v47 = vpop.permute.xlu0 %46
    %50 = vset.pattern.permute.xlu0 0
    %51 = vperm.xlu0 %50, %v35
    %v52 = vpop.permute.xlu0 %51
    %v54 = vlaneseq
    %v55 = vshrl.u32 %v54, 7
    %v56 = vsub.s32 3, %v55
    %v57 = vrot.slane %v33, %v56
    %v58 = vmul.f32 %v47, %v57
    %v59 = vmul.f32 %v52, %v57
    %61 = vset.pattern.permute.xlu0 0
    %62 = vperm.xlu0 %61, %v37
    %v63 = vpop.permute.xlu0 %62
    %66 = vset.pattern.permute.xlu0 0
    %67 = vperm.xlu0 %66, %v38
    %v68 = vpop.permute.xlu0 %67
    %v70 = vlaneseq
    %v71 = vshrl.u32 %v70, 7
    %v72 = vsub.s32 0, %v71
    %v73 = vrot.slane %v33, %v72
    %v74 = vmul.f32 %v63, %v73
    %v75 = vmul.f32 %v68, %v73
    %78 = vrot.lane.b32.xlu0 %v74, 120
    %v79 = vpop.permute.xlu0 %78
    %80 = vrot.lane.b32.xlu0 %v75, 120
    %v81 = vpop.permute.xlu0 %80
    %v84 = vadd.f32 %v58, %v79
    %v85 = vadd.f32 %v59, %v81
    %87 = vset.pattern.permute.xlu0 0
    %88 = vperm.xlu0 %87, %v40
    %v89 = vpop.permute.xlu0 %88
    %92 = vset.pattern.permute.xlu0 0
    %93 = vperm.xlu0 %92, %v41
    %v94 = vpop.permute.xlu0 %93
    %v96 = vlaneseq
    %v97 = vshrl.u32 %v96, 7
    %v98 = vsub.s32 1, %v97
    %v99 = vrot.slane %v33, %v98
    %v100 = vmul.f32 %v89, %v99
    %v101 = vmul.f32 %v94, %v99
    %104 = vrot.lane.b32.xlu0 %v100, 120
    %v105 = vpop.permute.xlu0 %104
    %106 = vrot.lane.b32.xlu0 %v101, 120
    %v107 = vpop.permute.xlu0 %106
    %v110 = vadd.f32 %v84, %v105
    %v111 = vadd.f32 %v85, %v107
    %113 = vset.pattern.permute.xlu0 0
    %114 = vperm.xlu0 %113, %v42
    %v115 = vpop.permute.xlu0 %114
    %118 = vset.pattern.permute.xlu0 0
    %119 = vperm.xlu0 %118, %v43
    %v120 = vpop.permute.xlu0 %119
    %v122 = vadd.f32 %v110, %v115
    %v123 = vadd.f32 %v111, %v120
    %vm124 = vcmp.gt.f32.partialorder %v122, 0.0
    %vm125 = vcmp.gt.f32.partialorder %v123, 0.0
    %v126 = vmul.f32 %v122, 0.01
    %v127 = vmul.f32 %v123, 0.01
    %v128 = vsel %vm124, %v122, %v126
    %v129 = vsel %vm125, %v123, %v127
    %v130 = vmul.f32 %v47, %v73
    %v131 = vmul.f32 %v52, %v73
    %v132 = vmul.f32 %v63, %v99
    %v133 = vmul.f32 %v68, %v99
    %v134 = vadd.f32 %v130, %v132
    %v135 = vadd.f32 %v131, %v133
    %v136 = vlaneseq
    %v137 = vshrl.u32 %v136, 7
    %v138 = vsub.s32 2, %v137
    %v139 = vrot.slane %v33, %v138
    %v140 = vmul.f32 %v89, %v139
    %v141 = vmul.f32 %v94, %v139
    %v142 = vadd.f32 %v134, %v140
    %v143 = vadd.f32 %v135, %v141
    %v144 = vadd.f32 %v142, %v115
    %v145 = vadd.f32 %v143, %v120
    %vm146 = vcmp.gt.f32.partialorder %v144, 0.0
    %vm147 = vcmp.gt.f32.partialorder %v145, 0.0
    %v148 = vmul.f32 %v144, 0.01
    %v149 = vmul.f32 %v145, 0.01
    %v150 = vsel %vm146, %v144, %v148
    %v151 = vsel %vm147, %v145, %v149
    %v152 = vmul.f32 %v47, %v99
    %v153 = vmul.f32 %v52, %v99
    %v154 = vmul.f32 %v63, %v139
    %v155 = vmul.f32 %v68, %v139
    %v156 = vadd.f32 %v152, %v154
    %v157 = vadd.f32 %v153, %v155
    %v158 = vmul.f32 %v89, %v57
    %v159 = vmul.f32 %v94, %v57
    %v160 = vadd.f32 %v156, %v158
    %v161 = vadd.f32 %v157, %v159
    %v162 = vadd.f32 %v160, %v115
    %v163 = vadd.f32 %v161, %v120
    %vm164 = vcmp.gt.f32.partialorder %v162, 0.0
    %vm165 = vcmp.gt.f32.partialorder %v163, 0.0
    %v166 = vmul.f32 %v162, 0.01
    %v167 = vmul.f32 %v163, 0.01
    %v168 = vsel %vm164, %v162, %v166
    %v169 = vsel %vm165, %v163, %v167
    %v170 = vmul.f32 %v47, %v139
    %v171 = vmul.f32 %v52, %v139
    %v172 = vmul.f32 %v63, %v57
    %v173 = vmul.f32 %v68, %v57
    %v174 = vadd.f32 %v170, %v172
    %v175 = vadd.f32 %v171, %v173
    %v176 = vmul.f32 %v89, %v73
    %v177 = vmul.f32 %v94, %v73
    %180 = vrot.lane.b32.xlu0 %v176, 120
    %v181 = vpop.permute.xlu0 %180
    %182 = vrot.lane.b32.xlu0 %v177, 120
    %v183 = vpop.permute.xlu0 %182
    %v186 = vadd.f32 %v174, %v181
    %v187 = vadd.f32 %v175, %v183
    %v188 = vadd.f32 %v186, %v115
    %v189 = vadd.f32 %v187, %v120
    %vm190 = vcmp.gt.f32.partialorder %v188, 0.0
    %vm191 = vcmp.gt.f32.partialorder %v189, 0.0
    %v192 = vmul.f32 %v188, 0.01
    %v193 = vmul.f32 %v189, 0.01
    %v194 = vsel %vm190, %v188, %v192
    %v195 = vsel %vm191, %v189, %v193
    %198 = vrot.lane.b32.xlu0 %v150, 120
    %v199 = vpop.permute.xlu0 %198
    %200 = vrot.lane.b32.xlu0 %v151, 120
    %v201 = vpop.permute.xlu0 %200
    %v204 = vmax.f32 %v128, %v199
    %v205 = vmax.f32 %v129, %v201
    %v206 = vmax.f32 %v168, %v194
    %v207 = vmax.f32 %v169, %v195
    %vm208 = vcmask 64512
    %209 = vst.msk [vmem:[#allocation2] sm:$0xff] %vm208, 0.0
    %210 = vst.msk [vmem:[#allocation2 + $0x8] sm:$0xff] %vm208, 0.0
    %vm211 = vcmask 326720
    %212 = vst.msk [vmem:[#allocation2] sm:$0xff] %vm211, %v206
    %213 = vst.msk [vmem:[#allocation2 + $0x8] sm:$0xff] %vm211, %v207
    %v214 = vld [vmem:[#allocation2] sm:$0xff]
    %v215 = vld [vmem:[#allocation2 + $0x8] sm:$0xff]
    %vm216 = vcmask 392512
    %217 = vst.msk [vmem:[#allocation3] sm:$0xff] %vm216, 0.0
    %218 = vst.msk [vmem:[#allocation3 + $0x8] sm:$0xff] %vm216, 0.0
    %221 = vrot.lane.b32.xlu0 %v204, 8
    %v222 = vpop.permute.xlu0 %221
    %223 = vrot.lane.b32.xlu0 %v205, 8
    %v224 = vpop.permute.xlu0 %223
    %227 = vst.msk [vmem:[#allocation3] sm:$0xff] %vm211, %v222
    %228 = vst.msk [vmem:[#allocation3 + $0x8] sm:$0xff] %vm211, %v224
    %v229 = vld [vmem:[#allocation3] sm:$0xff]
    %v230 = vld [vmem:[#allocation3 + $0x8] sm:$0xff]
    %v231 = vld [vmem:[%s3] sm:$0xff]
    %v232 = vld [vmem:[%s3 + $0x8] sm:$0xff]
    %v233 = vld [vmem:[%s3 + $0x10] sm:$0xff]
    %v234 = vld [vmem:[%s3 + $0x18] sm:$0xff]
    %s235 = scalar_lea.vmem %s3, 32
    %v236 = vld [vmem:[%s235] sm:$0xff]
    %v237 = vld [vmem:[%s235 + $0x8] sm:$0xff]
    %v238 = vld [vmem:[%s235 + $0x10] sm:$0xff]
    %v239 = vld [vmem:[%s235 + $0x18] sm:$0xff]
    %s240 = scalar_lea.vmem %s3, 64
    %v241 = vld [vmem:[%s240] sm:$0xff]
    %v242 = vld [vmem:[%s240 + $0x8] sm:$0xff]
    %v243 = vld [vmem:[%s240 + $0x10] sm:$0xff]
    %v244 = vld [vmem:[%s240 + $0x18] sm:$0xff]
    %v245 = vld [vmem:[%s4] sm:$0xff]
    %v246 = vld [vmem:[%s4 + $0x8] sm:$0xff]
    %v247 = vld [vmem:[%s4 + $0x10] sm:$0xff]
    %v248 = vld [vmem:[%s4 + $0x18] sm:$0xff]
    %vm249 = vcmask 130048
    %v251 = vsel %vm249, %v236, 0
    %v254 = vsel %vm249, %v237, 0
    %v257 = vsel %vm249, %v238, 0
    %v260 = vsel %vm249, %v239, 0
    %262 = vmatprep.subr.mxu0 0.0
    %263 = vmatpush1.msra.mxu0 %v204
    %264 = vmatprep.subr.mxu0 0.0
    %265 = vmatpush1.msra.mxu0 %v205
    %266 = vmatprep.subr.mxu0 0.0
    %267 = vmatpush1.msra.mxu0 0.0
    %268 = vmatprep.subr.mxu0 0.0
    %269 = vmatpush1.msra.mxu0 0.0
    %270 = vmatprep.subr.mxu0 0.0
    %271 = vmatpush1.msra.mxu0 0.0
    %272 = vmatprep.subr.mxu0 0.0
    %273 = vmatpush1.msra.mxu0 0.0
    %274 = vmatprep.subr.mxu0 0.0
    %275 = vmatpush1.msra.mxu0 0.0
    %276 = vmatprep.subr.mxu0 0.0
    %277 = vmatpush1.msra.mxu0 0.0
    %278 = vmatprep.subr.mxu0 0.0
    %279 = vmatpush1.msra.mxu0 0.0
    %280 = vmatprep.subr.mxu0 0.0
    %281 = vmatpush1.msra.mxu0 0.0
    %282 = vmatprep.subr.mxu0 0.0
    %283 = vmatpush1.msra.mxu0 0.0
    %284 = vmatprep.subr.mxu0 0.0
    %285 = vmatpush1.msra.mxu0 0.0
    %286 = vmatprep.subr.mxu0 0.0
    %287 = vmatpush1.msra.mxu0 0.0
    %288 = vmatprep.subr.mxu0 0.0
    %289 = vmatpush1.msra.mxu0 0.0
    %290 = vmatprep.subr.mxu0 0.0
    %291 = vmatpush1.msra.mxu0 0.0
    %292 = vmatprep.subr.mxu0 0.0
    %293 = vmatpush1.msra.mxu0 0.0
    %294 = vmatprep.subr.mxu0 0.0
    %295 = vmatpush1.msra.mxu0 0.0
    %296 = vmatprep.subr.mxu0 0.0
    %297 = vmatpush1.msra.mxu0 0.0
    %298 = vmatprep.subr.mxu0 0.0
    %299 = vmatpush1.msra.mxu0 0.0
    %300 = vmatprep.subr.mxu0 0.0
    %301 = vmatpush1.msra.mxu0 0.0
    %302 = vmatprep.subr.mxu0 0.0
    %303 = vmatpush1.msra.mxu0 0.0
    %304 = vmatprep.subr.mxu0 0.0
    %305 = vmatpush1.msra.mxu0 0.0
    %306 = vmatprep.subr.mxu0 0.0
    %307 = vmatpush1.msra.mxu0 0.0
    %308 = vmatprep.subr.mxu0 0.0
    %309 = vmatpush1.msra.mxu0 0.0
    %310 = vmatprep.subr.mxu0 0.0
    %311 = vmatpush1.msra.mxu0 0.0
    %312 = vmatprep.subr.mxu0 0.0
    %313 = vmatpush1.msra.mxu0 0.0
    %314 = vmatprep.subr.mxu0 0.0
    %315 = vmatpush1.msra.mxu0 0.0
    %316 = vmatprep.subr.mxu0 0.0
    %317 = vmatpush1.msra.mxu0 0.0
    %318 = vmatprep.subr.mxu0 0.0
    %319 = vmatpush1.msra.mxu0 0.0
    %320 = vmatprep.subr.mxu0 0.0
    %321 = vmatpush1.msra.mxu0 0.0
    %322 = vmatprep.subr.mxu0 0.0
    %323 = vmatpush1.msra.mxu0 0.0
    %324 = vmatprep.subr.mxu0 0.0
    %325 = vmatpush1.msra.mxu0 0.0
    %326 = vmatprep.mubr.f32.mxu0 0.0
    %327 = vmatmul.mubr.f32.gmra.mrb[0].mxu0 %v251
    %v328 = vpop.f32.mrb[0].mxu0
    %v329 = vadd.f32 0.0, %v328
    %v330 = vpop.f32.mrb[0].mxu0
    %331 = vmatprep.mubr.f32.mxu0 0.0
    %332 = vmatmul.mubr.f32.gmra.mrb[0].mxu0 %v254
    %v333 = vpop.f32.mrb[0].mxu0
    %v334 = vadd.f32 0.0, %v333
    %v335 = vpop.f32.mrb[0].mxu0
    %336 = vmatprep.mubr.f32.mxu0 0.0
    %337 = vmatmul.mubr.f32.gmra.mrb[0].mxu0 %v257
    %v338 = vpop.f32.mrb[0].mxu0
    %v339 = vadd.f32 0.0, %v338
    %v340 = vpop.f32.mrb[0].mxu0
    %341 = vmatprep.mubr.f32.mxu0 0.0
    %342 = vmatmul.mubr.f32.gmra.mrb[0].mxu0 %v260
    %v343 = vpop.f32.mrb[0].mxu0
    %v344 = vadd.f32 0.0, %v343
    %v345 = vpop.f32.mrb[0].mxu0
    %346 = vdwg.mxu0
    %v348 = vsel %vm249, %v231, 0
    %v351 = vsel %vm249, %v232, 0
    %v354 = vsel %vm249, %v233, 0
    %v357 = vsel %vm249, %v234, 0
    %359 = vmatprep.subr.mxu0 0.0
    %360 = vmatpush1.msra.mxu0 %v214
    %361 = vmatprep.subr.mxu0 0.0
    %362 = vmatpush1.msra.mxu0 %v215
    %363 = vmatprep.subr.mxu0 0.0
    %364 = vmatpush1.msra.mxu0 0.0
    %365 = vmatprep.subr.mxu0 0.0
    %366 = vmatpush1.msra.mxu0 0.0
    %367 = vmatprep.subr.mxu0 0.0
    %368 = vmatpush1.msra.mxu0 0.0
    %369 = vmatprep.subr.mxu0 0.0
    %370 = vmatpush1.msra.mxu0 0.0
    %371 = vmatprep.subr.mxu0 0.0
    %372 = vmatpush1.msra.mxu0 0.0
    %373 = vmatprep.subr.mxu0 0.0
    %374 = vmatpush1.msra.mxu0 0.0
    %375 = vmatprep.subr.mxu0 0.0
    %376 = vmatpush1.msra.mxu0 0.0
    %377 = vmatprep.subr.mxu0 0.0
    %378 = vmatpush1.msra.mxu0 0.0
    %379 = vmatprep.subr.mxu0 0.0
    %380 = vmatpush1.msra.mxu0 0.0
    %381 = vmatprep.subr.mxu0 0.0
    %382 = vmatpush1.msra.mxu0 0.0
    %383 = vmatprep.subr.mxu0 0.0
    %384 = vmatpush1.msra.mxu0 0.0
    %385 = vmatprep.subr.mxu0 0.0
    %386 = vmatpush1.msra.mxu0 0.0
    %387 = vmatprep.subr.mxu0 0.0
    %388 = vmatpush1.msra.mxu0 0.0
    %389 = vmatprep.subr.mxu0 0.0
    %390 = vmatpush1.msra.mxu0 0.0
    %391 = vmatprep.subr.mxu0 0.0
    %392 = vmatpush1.msra.mxu0 0.0
    %393 = vmatprep.subr.mxu0 0.0
    %394 = vmatpush1.msra.mxu0 0.0
    %395 = vmatprep.subr.mxu0 0.0
    %396 = vmatpush1.msra.mxu0 0.0
    %397 = vmatprep.subr.mxu0 0.0
    %398 = vmatpush1.msra.mxu0 0.0
    %399 = vmatprep.subr.mxu0 0.0
    %400 = vmatpush1.msra.mxu0 0.0
    %401 = vmatprep.subr.mxu0 0.0
    %402 = vmatpush1.msra.mxu0 0.0
    %403 = vmatprep.subr.mxu0 0.0
    %404 = vmatpush1.msra.mxu0 0.0
    %405 = vmatprep.subr.mxu0 0.0
    %406 = vmatpush1.msra.mxu0 0.0
    %407 = vmatprep.subr.mxu0 0.0
    %408 = vmatpush1.msra.mxu0 0.0
    %409 = vmatprep.subr.mxu0 0.0
    %410 = vmatpush1.msra.mxu0 0.0
    %411 = vmatprep.subr.mxu0 0.0
    %412 = vmatpush1.msra.mxu0 0.0
    %413 = vmatprep.subr.mxu0 0.0
    %414 = vmatpush1.msra.mxu0 0.0
    %415 = vmatprep.subr.mxu0 0.0
    %416 = vmatpush1.msra.mxu0 0.0
    %417 = vmatprep.subr.mxu0 0.0
    %418 = vmatpush1.msra.mxu0 0.0
    %419 = vmatprep.subr.mxu0 0.0
    %420 = vmatpush1.msra.mxu0 0.0
    %421 = vmatprep.subr.mxu0 0.0
    %422 = vmatpush1.msra.mxu0 0.0
    %423 = vmatprep.mubr.f32.mxu0 0.0
    %424 = vmatmul.mubr.f32.gmra.mrb[0].mxu0 %v348
    %v425 = vpop.f32.mrb[0].mxu0
    %v426 = vadd.f32 %v329, %v425
    %v427 = vpop.f32.mrb[0].mxu0
    %428 = vmatprep.mubr.f32.mxu0 0.0
    %429 = vmatmul.mubr.f32.gmra.mrb[0].mxu0 %v351
    %v430 = vpop.f32.mrb[0].mxu0
    %v431 = vadd.f32 %v334, %v430
    %v432 = vpop.f32.mrb[0].mxu0
    %433 = vmatprep.mubr.f32.mxu0 0.0
    %434 = vmatmul.mubr.f32.gmra.mrb[0].mxu0 %v354
    %v435 = vpop.f32.mrb[0].mxu0
    %v436 = vadd.f32 %v339, %v435
    %v437 = vpop.f32.mrb[0].mxu0
    %438 = vmatprep.mubr.f32.mxu0 0.0
    %439 = vmatmul.mubr.f32.gmra.mrb[0].mxu0 %v357
    %v440 = vpop.f32.mrb[0].mxu0
    %v441 = vadd.f32 %v344, %v440
    %v442 = vpop.f32.mrb[0].mxu0
    %443 = vdwg.mxu0
    %446 = vrot.lane.b32.xlu0 %v206, 120
    %v447 = vpop.permute.xlu0 %446
    %448 = vrot.lane.b32.xlu0 %v207, 120
    %v449 = vpop.permute.xlu0 %448
    %v453 = vsel %vm249, %v241, 0
    %v456 = vsel %vm249, %v242, 0
    %v459 = vsel %vm249, %v243, 0
    %v462 = vsel %vm249, %v244, 0
    %464 = vmatprep.subr.mxu0 0.0
    %465 = vmatpush1.msra.mxu0 %v447
    %466 = vmatprep.subr.mxu0 0.0
    %467 = vmatpush1.msra.mxu0 %v449
    %468 = vmatprep.subr.mxu0 0.0
    %469 = vmatpush1.msra.mxu0 0.0
    %470 = vmatprep.subr.mxu0 0.0
    %471 = vmatpush1.msra.mxu0 0.0
    %472 = vmatprep.subr.mxu0 0.0
    %473 = vmatpush1.msra.mxu0 0.0
    %474 = vmatprep.subr.mxu0 0.0
    %475 = vmatpush1.msra.mxu0 0.0
    %476 = vmatprep.subr.mxu0 0.0
    %477 = vmatpush1.msra.mxu0 0.0
    %478 = vmatprep.subr.mxu0 0.0
    %479 = vmatpush1.msra.mxu0 0.0
    %480 = vmatprep.subr.mxu0 0.0
    %481 = vmatpush1.msra.mxu0 0.0
    %482 = vmatprep.subr.mxu0 0.0
    %483 = vmatpush1.msra.mxu0 0.0
    %484 = vmatprep.subr.mxu0 0.0
    %485 = vmatpush1.msra.mxu0 0.0
    %486 = vmatprep.subr.mxu0 0.0
    %487 = vmatpush1.msra.mxu0 0.0
    %488 = vmatprep.subr.mxu0 0.0
    %489 = vmatpush1.msra.mxu0 0.0
    %490 = vmatprep.subr.mxu0 0.0
    %491 = vmatpush1.msra.mxu0 0.0
    %492 = vmatprep.subr.mxu0 0.0
    %493 = vmatpush1.msra.mxu0 0.0
    %494 = vmatprep.subr.mxu0 0.0
    %495 = vmatpush1.msra.mxu0 0.0
    %496 = vmatprep.subr.mxu0 0.0
    %497 = vmatpush1.msra.mxu0 0.0
    %498 = vmatprep.subr.mxu0 0.0
    %499 = vmatpush1.msra.mxu0 0.0
    %500 = vmatprep.subr.mxu0 0.0
    %501 = vmatpush1.msra.mxu0 0.0
    %502 = vmatprep.subr.mxu0 0.0
    %503 = vmatpush1.msra.mxu0 0.0
    %504 = vmatprep.subr.mxu0 0.0
    %505 = vmatpush1.msra.mxu0 0.0
    %506 = vmatprep.subr.mxu0 0.0
    %507 = vmatpush1.msra.mxu0 0.0
    %508 = vmatprep.subr.mxu0 0.0
    %509 = vmatpush1.msra.mxu0 0.0
    %510 = vmatprep.subr.mxu0 0.0
    %511 = vmatpush1.msra.mxu0 0.0
    %512 = vmatprep.subr.mxu0 0.0
    %513 = vmatpush1.msra.mxu0 0.0
    %514 = vmatprep.subr.mxu0 0.0
    %515 = vmatpush1.msra.mxu0 0.0
    %516 = vmatprep.subr.mxu0 0.0
    %517 = vmatpush1.msra.mxu0 0.0
    %518 = vmatprep.subr.mxu0 0.0
    %519 = vmatpush1.msra.mxu0 0.0
    %520 = vmatprep.subr.mxu0 0.0
    %521 = vmatpush1.msra.mxu0 0.0
    %522 = vmatprep.subr.mxu0 0.0
    %523 = vmatpush1.msra.mxu0 0.0
    %524 = vmatprep.subr.mxu0 0.0
    %525 = vmatpush1.msra.mxu0 0.0
    %526 = vmatprep.subr.mxu0 0.0
    %527 = vmatpush1.msra.mxu0 0.0
    %528 = vmatprep.mubr.f32.mxu0 0.0
    %529 = vmatmul.mubr.f32.gmra.mrb[0].mxu0 %v453
    %v530 = vpop.f32.mrb[0].mxu0
    %v531 = vadd.f32 0.0, %v530
    %v532 = vpop.f32.mrb[0].mxu0
    %533 = vmatprep.mubr.f32.mxu0 0.0
    %534 = vmatmul.mubr.f32.gmra.mrb[0].mxu0 %v456
    %v535 = vpop.f32.mrb[0].mxu0
    %v536 = vadd.f32 0.0, %v535
    %v537 = vpop.f32.mrb[0].mxu0
    %538 = vmatprep.mubr.f32.mxu0 0.0
    %539 = vmatmul.mubr.f32.gmra.mrb[0].mxu0 %v459
    %v540 = vpop.f32.mrb[0].mxu0
    %v541 = vadd.f32 0.0, %v540
    %v542 = vpop.f32.mrb[0].mxu0
    %543 = vmatprep.mubr.f32.mxu0 0.0
    %544 = vmatmul.mubr.f32.gmra.mrb[0].mxu0 %v462
    %v545 = vpop.f32.mrb[0].mxu0
    %v546 = vadd.f32 0.0, %v545
    %v547 = vpop.f32.mrb[0].mxu0
    %548 = vdwg.mxu0
    %v549 = vadd.f32 %v426, %v531
    %v550 = vadd.f32 %v431, %v536
    %v551 = vadd.f32 %v436, %v541
    %v552 = vadd.f32 %v441, %v546
    %554 = vset.pattern.permute.xlu0 0
    %555 = vperm.xlu0 %554, %v245
    %v556 = vpop.permute.xlu0 %555
    %559 = vset.pattern.permute.xlu0 0
    %560 = vperm.xlu0 %559, %v246
    %v561 = vpop.permute.xlu0 %560
    %564 = vset.pattern.permute.xlu0 0
    %565 = vperm.xlu0 %564, %v247
    %v566 = vpop.permute.xlu0 %565
    %569 = vset.pattern.permute.xlu0 0
    %570 = vperm.xlu0 %569, %v248
    %v571 = vpop.permute.xlu0 %570
    %v573 = vadd.f32 %v549, %v556
    %v574 = vadd.f32 %v550, %v561
    %v575 = vadd.f32 %v551, %v566
    %v576 = vadd.f32 %v552, %v571
    %vm577 = vcmp.gt.f32.partialorder %v573, 0.0
    %vm578 = vcmp.gt.f32.partialorder %v574, 0.0
    %vm579 = vcmp.gt.f32.partialorder %v575, 0.0
    %vm580 = vcmp.gt.f32.partialorder %v576, 0.0
    %v581 = vmul.f32 %v573, 0.01
    %v582 = vmul.f32 %v574, 0.01
    %v583 = vmul.f32 %v575, 0.01
    %v584 = vmul.f32 %v576, 0.01
    %v585 = vsel %vm577, %v573, %v581
    %v586 = vsel %vm578, %v574, %v582
    %v587 = vsel %vm579, %v575, %v583
    %v588 = vsel %vm580, %v576, %v584
    %589 = vmatprep.subr.mxu0 0.0
    %590 = vmatpush1.msra.mxu0 %v447
    %591 = vmatprep.subr.mxu0 0.0
    %592 = vmatpush1.msra.mxu0 %v449
    %593 = vmatprep.subr.mxu0 0.0
    %594 = vmatpush1.msra.mxu0 0.0
    %595 = vmatprep.subr.mxu0 0.0
    %596 = vmatpush1.msra.mxu0 0.0
    %597 = vmatprep.subr.mxu0 0.0
    %598 = vmatpush1.msra.mxu0 0.0
    %599 = vmatprep.subr.mxu0 0.0
    %600 = vmatpush1.msra.mxu0 0.0
    %601 = vmatprep.subr.mxu0 0.0
    %602 = vmatpush1.msra.mxu0 0.0
    %603 = vmatprep.subr.mxu0 0.0
    %604 = vmatpush1.msra.mxu0 0.0
    %605 = vmatprep.subr.mxu0 0.0
    %606 = vmatpush1.msra.mxu0 0.0
    %607 = vmatprep.subr.mxu0 0.0
    %608 = vmatpush1.msra.mxu0 0.0
    %609 = vmatprep.subr.mxu0 0.0
    %610 = vmatpush1.msra.mxu0 0.0
    %611 = vmatprep.subr.mxu0 0.0
    %612 = vmatpush1.msra.mxu0 0.0
    %613 = vmatprep.subr.mxu0 0.0
    %614 = vmatpush1.msra.mxu0 0.0
    %615 = vmatprep.subr.mxu0 0.0
    %616 = vmatpush1.msra.mxu0 0.0
    %617 = vmatprep.subr.mxu0 0.0
    %618 = vmatpush1.msra.mxu0 0.0
    %619 = vmatprep.subr.mxu0 0.0
    %620 = vmatpush1.msra.mxu0 0.0
    %621 = vmatprep.subr.mxu0 0.0
    %622 = vmatpush1.msra.mxu0 0.0
    %623 = vmatprep.subr.mxu0 0.0
    %624 = vmatpush1.msra.mxu0 0.0
    %625 = vmatprep.subr.mxu0 0.0
    %626 = vmatpush1.msra.mxu0 0.0
    %627 = vmatprep.subr.mxu0 0.0
    %628 = vmatpush1.msra.mxu0 0.0
    %629 = vmatprep.subr.mxu0 0.0
    %630 = vmatpush1.msra.mxu0 0.0
    %631 = vmatprep.subr.mxu0 0.0
    %632 = vmatpush1.msra.mxu0 0.0
    %633 = vmatprep.subr.mxu0 0.0
    %634 = vmatpush1.msra.mxu0 0.0
    %635 = vmatprep.subr.mxu0 0.0
    %636 = vmatpush1.msra.mxu0 0.0
    %637 = vmatprep.subr.mxu0 0.0
    %638 = vmatpush1.msra.mxu0 0.0
    %639 = vmatprep.subr.mxu0 0.0
    %640 = vmatpush1.msra.mxu0 0.0
    %641 = vmatprep.subr.mxu0 0.0
    %642 = vmatpush1.msra.mxu0 0.0
    %643 = vmatprep.subr.mxu0 0.0
    %644 = vmatpush1.msra.mxu0 0.0
    %645 = vmatprep.subr.mxu0 0.0
    %646 = vmatpush1.msra.mxu0 0.0
    %647 = vmatprep.subr.mxu0 0.0
    %648 = vmatpush1.msra.mxu0 0.0
    %649 = vmatprep.subr.mxu0 0.0
    %650 = vmatpush1.msra.mxu0 0.0
    %651 = vmatprep.subr.mxu0 0.0
    %652 = vmatpush1.msra.mxu0 0.0
    %653 = vmatprep.mubr.f32.mxu0 0.0
    %654 = vmatmul.mubr.f32.gmra.mrb[0].mxu0 %v251
    %v655 = vpop.f32.mrb[0].mxu0
    %v656 = vadd.f32 0.0, %v655
    %v657 = vpop.f32.mrb[0].mxu0
    %658 = vmatprep.mubr.f32.mxu0 0.0
    %659 = vmatmul.mubr.f32.gmra.mrb[0].mxu0 %v254
    %v660 = vpop.f32.mrb[0].mxu0
    %v661 = vadd.f32 0.0, %v660
    %v662 = vpop.f32.mrb[0].mxu0
    %663 = vmatprep.mubr.f32.mxu0 0.0
    %664 = vmatmul.mubr.f32.gmra.mrb[0].mxu0 %v257
    %v665 = vpop.f32.mrb[0].mxu0
    %v666 = vadd.f32 0.0, %v665
    %v667 = vpop.f32.mrb[0].mxu0
    %668 = vmatprep.mubr.f32.mxu0 0.0
    %669 = vmatmul.mubr.f32.gmra.mrb[0].mxu0 %v260
    %v670 = vpop.f32.mrb[0].mxu0
    %v671 = vadd.f32 0.0, %v670
    %v672 = vpop.f32.mrb[0].mxu0
    %673 = vdwg.mxu0
    %674 = vmatprep.subr.mxu0 0.0
    %675 = vmatpush1.msra.mxu0 %v204
    %676 = vmatprep.subr.mxu0 0.0
    %677 = vmatpush1.msra.mxu0 %v205
    %678 = vmatprep.subr.mxu0 0.0
    %679 = vmatpush1.msra.mxu0 0.0
    %680 = vmatprep.subr.mxu0 0.0
    %681 = vmatpush1.msra.mxu0 0.0
    %682 = vmatprep.subr.mxu0 0.0
    %683 = vmatpush1.msra.mxu0 0.0
    %684 = vmatprep.subr.mxu0 0.0
    %685 = vmatpush1.msra.mxu0 0.0
    %686 = vmatprep.subr.mxu0 0.0
    %687 = vmatpush1.msra.mxu0 0.0
    %688 = vmatprep.subr.mxu0 0.0
    %689 = vmatpush1.msra.mxu0 0.0
    %690 = vmatprep.subr.mxu0 0.0
    %691 = vmatpush1.msra.mxu0 0.0
    %692 = vmatprep.subr.mxu0 0.0
    %693 = vmatpush1.msra.mxu0 0.0
    %694 = vmatprep.subr.mxu0 0.0
    %695 = vmatpush1.msra.mxu0 0.0
    %696 = vmatprep.subr.mxu0 0.0
    %697 = vmatpush1.msra.mxu0 0.0
    %698 = vmatprep.subr.mxu0 0.0
    %699 = vmatpush1.msra.mxu0 0.0
    %700 = vmatprep.subr.mxu0 0.0
    %701 = vmatpush1.msra.mxu0 0.0
    %702 = vmatprep.subr.mxu0 0.0
    %703 = vmatpush1.msra.mxu0 0.0
    %704 = vmatprep.subr.mxu0 0.0
    %705 = vmatpush1.msra.mxu0 0.0
    %706 = vmatprep.subr.mxu0 0.0
    %707 = vmatpush1.msra.mxu0 0.0
    %708 = vmatprep.subr.mxu0 0.0
    %709 = vmatpush1.msra.mxu0 0.0
    %710 = vmatprep.subr.mxu0 0.0
    %711 = vmatpush1.msra.mxu0 0.0
    %712 = vmatprep.subr.mxu0 0.0
    %713 = vmatpush1.msra.mxu0 0.0
    %714 = vmatprep.subr.mxu0 0.0
    %715 = vmatpush1.msra.mxu0 0.0
    %716 = vmatprep.subr.mxu0 0.0
    %717 = vmatpush1.msra.mxu0 0.0
    %718 = vmatprep.subr.mxu0 0.0
    %719 = vmatpush1.msra.mxu0 0.0
    %720 = vmatprep.subr.mxu0 0.0
    %721 = vmatpush1.msra.mxu0 0.0
    %722 = vmatprep.subr.mxu0 0.0
    %723 = vmatpush1.msra.mxu0 0.0
    %724 = vmatprep.subr.mxu0 0.0
    %725 = vmatpush1.msra.mxu0 0.0
    %726 = vmatprep.subr.mxu0 0.0
    %727 = vmatpush1.msra.mxu0 0.0
    %728 = vmatprep.subr.mxu0 0.0
    %729 = vmatpush1.msra.mxu0 0.0
    %730 = vmatprep.subr.mxu0 0.0
    %731 = vmatpush1.msra.mxu0 0.0
    %732 = vmatprep.subr.mxu0 0.0
    %733 = vmatpush1.msra.mxu0 0.0
    %734 = vmatprep.subr.mxu0 0.0
    %735 = vmatpush1.msra.mxu0 0.0
    %736 = vmatprep.subr.mxu0 0.0
    %737 = vmatpush1.msra.mxu0 0.0
    %738 = vmatprep.mubr.f32.mxu0 0.0
    %739 = vmatmul.mubr.f32.gmra.mrb[0].mxu0 %v348
    %v740 = vpop.f32.mrb[0].mxu0
    %v741 = vadd.f32 %v656, %v740
    %v742 = vpop.f32.mrb[0].mxu0
    %743 = vmatprep.mubr.f32.mxu0 0.0
    %744 = vmatmul.mubr.f32.gmra.mrb[0].mxu0 %v351
    %v745 = vpop.f32.mrb[0].mxu0
    %v746 = vadd.f32 %v661, %v745
    %v747 = vpop.f32.mrb[0].mxu0
    %748 = vmatprep.mubr.f32.mxu0 0.0
    %749 = vmatmul.mubr.f32.gmra.mrb[0].mxu0 %v354
    %v750 = vpop.f32.mrb[0].mxu0
    %v751 = vadd.f32 %v666, %v750
    %v752 = vpop.f32.mrb[0].mxu0
    %753 = vmatprep.mubr.f32.mxu0 0.0
    %754 = vmatmul.mubr.f32.gmra.mrb[0].mxu0 %v357
    %v755 = vpop.f32.mrb[0].mxu0
    %v756 = vadd.f32 %v671, %v755
    %v757 = vpop.f32.mrb[0].mxu0
    %758 = vdwg.mxu0
    %761 = vrot.lane.b32.xlu0 %v229, 112
    %v762 = vpop.permute.xlu0 %761
    %763 = vrot.lane.b32.xlu0 %v230, 112
    %v764 = vpop.permute.xlu0 %763
    %767 = vmatprep.subr.mxu0 0.0
    %768 = vmatpush1.msra.mxu0 %v762
    %769 = vmatprep.subr.mxu0 0.0
    %770 = vmatpush1.msra.mxu0 %v764
    %771 = vmatprep.subr.mxu0 0.0
    %772 = vmatpush1.msra.mxu0 0.0
    %773 = vmatprep.subr.mxu0 0.0
    %774 = vmatpush1.msra.mxu0 0.0
    %775 = vmatprep.subr.mxu0 0.0
    %776 = vmatpush1.msra.mxu0 0.0
    %777 = vmatprep.subr.mxu0 0.0
    %778 = vmatpush1.msra.mxu0 0.0
    %779 = vmatprep.subr.mxu0 0.0
    %780 = vmatpush1.msra.mxu0 0.0
    %781 = vmatprep.subr.mxu0 0.0
    %782 = vmatpush1.msra.mxu0 0.0
    %783 = vmatprep.subr.mxu0 0.0
    %784 = vmatpush1.msra.mxu0 0.0
    %785 = vmatprep.subr.mxu0 0.0
    %786 = vmatpush1.msra.mxu0 0.0
    %787 = vmatprep.subr.mxu0 0.0
    %788 = vmatpush1.msra.mxu0 0.0
    %789 = vmatprep.subr.mxu0 0.0
    %790 = vmatpush1.msra.mxu0 0.0
    %791 = vmatprep.subr.mxu0 0.0
    %792 = vmatpush1.msra.mxu0 0.0
    %793 = vmatprep.subr.mxu0 0.0
    %794 = vmatpush1.msra.mxu0 0.0
    %795 = vmatprep.subr.mxu0 0.0
    %796 = vmatpush1.msra.mxu0 0.0
    %797 = vmatprep.subr.mxu0 0.0
    %798 = vmatpush1.msra.mxu0 0.0
    %799 = vmatprep.subr.mxu0 0.0
    %800 = vmatpush1.msra.mxu0 0.0
    %801 = vmatprep.subr.mxu0 0.0
    %802 = vmatpush1.msra.mxu0 0.0
    %803 = vmatprep.subr.mxu0 0.0
    %804 = vmatpush1.msra.mxu0 0.0
    %805 = vmatprep.subr.mxu0 0.0
    %806 = vmatpush1.msra.mxu0 0.0
    %807 = vmatprep.subr.mxu0 0.0
    %808 = vmatpush1.msra.mxu0 0.0
    %809 = vmatprep.subr.mxu0 0.0
    %810 = vmatpush1.msra.mxu0 0.0
    %811 = vmatprep.subr.mxu0 0.0
    %812 = vmatpush1.msra.mxu0 0.0
    %813 = vmatprep.subr.mxu0 0.0
    %814 = vmatpush1.msra.mxu0 0.0
    %815 = vmatprep.subr.mxu0 0.0
    %816 = vmatpush1.msra.mxu0 0.0
    %817 = vmatprep.subr.mxu0 0.0
    %818 = vmatpush1.msra.mxu0 0.0
    %819 = vmatprep.subr.mxu0 0.0
    %820 = vmatpush1.msra.mxu0 0.0
    %821 = vmatprep.subr.mxu0 0.0
    %822 = vmatpush1.msra.mxu0 0.0
    %823 = vmatprep.subr.mxu0 0.0
    %824 = vmatpush1.msra.mxu0 0.0
    %825 = vmatprep.subr.mxu0 0.0
    %826 = vmatpush1.msra.mxu0 0.0
    %827 = vmatprep.subr.mxu0 0.0
    %828 = vmatpush1.msra.mxu0 0.0
    %829 = vmatprep.subr.mxu0 0.0
    %830 = vmatpush1.msra.mxu0 0.0
    %831 = vmatprep.mubr.f32.mxu0 0.0
    %832 = vmatmul.mubr.f32.gmra.mrb[0].mxu0 %v453
    %v833 = vpop.f32.mrb[0].mxu0
    %v834 = vadd.f32 0.0, %v833
    %v835 = vpop.f32.mrb[0].mxu0
    %836 = vmatprep.mubr.f32.mxu0 0.0
    %837 = vmatmul.mubr.f32.gmra.mrb[0].mxu0 %v456
    %v838 = vpop.f32.mrb[0].mxu0
    %v839 = vadd.f32 0.0, %v838
    %v840 = vpop.f32.mrb[0].mxu0
    %841 = vmatprep.mubr.f32.mxu0 0.0
    %842 = vmatmul.mubr.f32.gmra.mrb[0].mxu0 %v459
    %v843 = vpop.f32.mrb[0].mxu0
    %v844 = vadd.f32 0.0, %v843
    %v845 = vpop.f32.mrb[0].mxu0
    %846 = vmatprep.mubr.f32.mxu0 0.0
    %847 = vmatmul.mubr.f32.gmra.mrb[0].mxu0 %v462
    %v848 = vpop.f32.mrb[0].mxu0
    %v849 = vadd.f32 0.0, %v848
    %v850 = vpop.f32.mrb[0].mxu0
    %851 = vdwg.mxu0
    %v852 = vadd.f32 %v741, %v834
    %v853 = vadd.f32 %v746, %v839
    %v854 = vadd.f32 %v751, %v844
    %v855 = vadd.f32 %v756, %v849
    %v856 = vadd.f32 %v852, %v556
    %v857 = vadd.f32 %v853, %v561
    %v858 = vadd.f32 %v854, %v566
    %v859 = vadd.f32 %v855, %v571
    %vm860 = vcmp.gt.f32.partialorder %v856, 0.0
    %vm861 = vcmp.gt.f32.partialorder %v857, 0.0
    %vm862 = vcmp.gt.f32.partialorder %v858, 0.0
    %vm863 = vcmp.gt.f32.partialorder %v859, 0.0
    %v864 = vmul.f32 %v856, 0.01
    %v865 = vmul.f32 %v857, 0.01
    %v866 = vmul.f32 %v858, 0.01
    %v867 = vmul.f32 %v859, 0.01
    %v868 = vsel %vm860, %v856, %v864
    %v869 = vsel %vm861, %v857, %v865
    %v870 = vsel %vm862, %v858, %v866
    %v871 = vsel %vm863, %v859, %v867
    %v872 = vmax.f32 %v585, %v868
    %v873 = vmax.f32 %v586, %v869
    %v874 = vmax.f32 %v587, %v870
    %v875 = vmax.f32 %v588, %v871
    %v876 = vld [vmem:[%s5] sm:$0xff]
    %v877 = vld [vmem:[%s5 + $0x8] sm:$0xff]
    %v878 = vld [vmem:[%s5 + $0x10] sm:$0xff]
    %v879 = vld [vmem:[%s5 + $0x18] sm:$0xff]
    %s880 = scalar_lea.vmem %s5, 32
    %v881 = vld [vmem:[%s880] sm:$0xff]
    %v882 = vld [vmem:[%s880 + $0x8] sm:$0xff]
    %v883 = vld [vmem:[%s880 + $0x10] sm:$0xff]
    %v884 = vld [vmem:[%s880 + $0x18] sm:$0xff]
    %889 = vrot.lane.b32.xlu0 %v872, 120
    %v890 = vpop.permute.xlu0 %889
    %891 = vrot.lane.b32.xlu0 %v873, 120
    %v892 = vpop.permute.xlu0 %891
    %893 = vrot.lane.b32.xlu0 %v874, 120
    %v894 = vpop.permute.xlu0 %893
    %895 = vrot.lane.b32.xlu0 %v875, 120
    %v896 = vpop.permute.xlu0 %895
    %vm901 = vcmask 261120
    %v903 = vsel %vm901, %v881, 0
    %v906 = vsel %vm901, %v882, 0
    %v909 = vsel %vm901, %v883, 0
    %v912 = vsel %vm901, %v884, 0
    %914 = vmatprep.subr.mxu0 0.0
    %915 = vmatpush1.msra.mxu0 %v890
    %916 = vmatprep.subr.mxu0 0.0
    %917 = vmatpush1.msra.mxu0 %v892
    %918 = vmatprep.subr.mxu0 0.0
    %919 = vmatpush1.msra.mxu0 %v894
    %920 = vmatprep.subr.mxu0 0.0
    %921 = vmatpush1.msra.mxu0 %v896
    %922 = vmatprep.subr.mxu0 0.0
    %923 = vmatpush1.msra.mxu0 0.0
    %924 = vmatprep.subr.mxu0 0.0
    %925 = vmatpush1.msra.mxu0 0.0
    %926 = vmatprep.subr.mxu0 0.0
    %927 = vmatpush1.msra.mxu0 0.0
    %928 = vmatprep.subr.mxu0 0.0
    %929 = vmatpush1.msra.mxu0 0.0
    %930 = vmatprep.subr.mxu0 0.0
    %931 = vmatpush1.msra.mxu0 0.0
    %932 = vmatprep.subr.mxu0 0.0
    %933 = vmatpush1.msra.mxu0 0.0
    %934 = vmatprep.subr.mxu0 0.0
    %935 = vmatpush1.msra.mxu0 0.0
    %936 = vmatprep.subr.mxu0 0.0
    %937 = vmatpush1.msra.mxu0 0.0
    %938 = vmatprep.subr.mxu0 0.0
    %939 = vmatpush1.msra.mxu0 0.0
    %940 = vmatprep.subr.mxu0 0.0
    %941 = vmatpush1.msra.mxu0 0.0
    %942 = vmatprep.subr.mxu0 0.0
    %943 = vmatpush1.msra.mxu0 0.0
    %944 = vmatprep.subr.mxu0 0.0
    %945 = vmatpush1.msra.mxu0 0.0
    %946 = vmatprep.subr.mxu0 0.0
    %947 = vmatpush1.msra.mxu0 0.0
    %948 = vmatprep.subr.mxu0 0.0
    %949 = vmatpush1.msra.mxu0 0.0
    %950 = vmatprep.subr.mxu0 0.0
    %951 = vmatpush1.msra.mxu0 0.0
    %952 = vmatprep.subr.mxu0 0.0
    %953 = vmatpush1.msra.mxu0 0.0
    %954 = vmatprep.subr.mxu0 0.0
    %955 = vmatpush1.msra.mxu0 0.0
    %956 = vmatprep.subr.mxu0 0.0
    %957 = vmatpush1.msra.mxu0 0.0
    %958 = vmatprep.subr.mxu0 0.0
    %959 = vmatpush1.msra.mxu0 0.0
    %960 = vmatprep.subr.mxu0 0.0
    %961 = vmatpush1.msra.mxu0 0.0
    %962 = vmatprep.subr.mxu0 0.0
    %963 = vmatpush1.msra.mxu0 0.0
    %964 = vmatprep.subr.mxu0 0.0
    %965 = vmatpush1.msra.mxu0 0.0
    %966 = vmatprep.subr.mxu0 0.0
    %967 = vmatpush1.msra.mxu0 0.0
    %968 = vmatprep.subr.mxu0 0.0
    %969 = vmatpush1.msra.mxu0 0.0
    %970 = vmatprep.subr.mxu0 0.0
    %971 = vmatpush1.msra.mxu0 0.0
    %972 = vmatprep.subr.mxu0 0.0
    %973 = vmatpush1.msra.mxu0 0.0
    %974 = vmatprep.subr.mxu0 0.0
    %975 = vmatpush1.msra.mxu0 0.0
    %976 = vmatprep.subr.mxu0 0.0
    %977 = vmatpush1.msra.mxu0 0.0
    %978 = vmatprep.mubr.f32.mxu0 0.0
    %979 = vmatmul.mubr.f32.gmra.mrb[0].mxu0 %v903
    %v980 = vpop.f32.mrb[0].mxu0
    %v981 = vadd.f32 0.0, %v980
    %v982 = vpop.f32.mrb[0].mxu0
    %983 = vmatprep.mubr.f32.mxu0 0.0
    %984 = vmatmul.mubr.f32.gmra.mrb[0].mxu0 %v906
    %v985 = vpop.f32.mrb[0].mxu0
    %v986 = vadd.f32 0.0, %v985
    %v987 = vpop.f32.mrb[0].mxu0
    %988 = vmatprep.mubr.f32.mxu0 0.0
    %989 = vmatmul.mubr.f32.gmra.mrb[0].mxu0 %v909
    %v990 = vpop.f32.mrb[0].mxu0
    %v991 = vadd.f32 0.0, %v990
    %v992 = vpop.f32.mrb[0].mxu0
    %993 = vmatprep.mubr.f32.mxu0 0.0
    %994 = vmatmul.mubr.f32.gmra.mrb[0].mxu0 %v912
    %v995 = vpop.f32.mrb[0].mxu0
    %v996 = vadd.f32 0.0, %v995
    %v997 = vpop.f32.mrb[0].mxu0
    %998 = vdwg.mxu0
    %v1000 = vsel %vm901, %v876, 0
    %v1003 = vsel %vm901, %v877, 0
    %v1006 = vsel %vm901, %v878, 0
    %v1009 = vsel %vm901, %v879, 0
    %1011 = vmatprep.subr.mxu0 0.0
    %1012 = vmatpush1.msra.mxu0 %v872
    %1013 = vmatprep.subr.mxu0 0.0
    %1014 = vmatpush1.msra.mxu0 %v873
    %1015 = vmatprep.subr.mxu0 0.0
    %1016 = vmatpush1.msra.mxu0 %v874
    %1017 = vmatprep.subr.mxu0 0.0
    %1018 = vmatpush1.msra.mxu0 %v875
    %1019 = vmatprep.subr.mxu0 0.0
    %1020 = vmatpush1.msra.mxu0 0.0
    %1021 = vmatprep.subr.mxu0 0.0
    %1022 = vmatpush1.msra.mxu0 0.0
    %1023 = vmatprep.subr.mxu0 0.0
    %1024 = vmatpush1.msra.mxu0 0.0
    %1025 = vmatprep.subr.mxu0 0.0
    %1026 = vmatpush1.msra.mxu0 0.0
    %1027 = vmatprep.subr.mxu0 0.0
    %1028 = vmatpush1.msra.mxu0 0.0
    %1029 = vmatprep.subr.mxu0 0.0
    %1030 = vmatpush1.msra.mxu0 0.0
    %1031 = vmatprep.subr.mxu0 0.0
    %1032 = vmatpush1.msra.mxu0 0.0
    %1033 = vmatprep.subr.mxu0 0.0
    %1034 = vmatpush1.msra.mxu0 0.0
    %1035 = vmatprep.subr.mxu0 0.0
    %1036 = vmatpush1.msra.mxu0 0.0
    %1037 = vmatprep.subr.mxu0 0.0
    %1038 = vmatpush1.msra.mxu0 0.0
    %1039 = vmatprep.subr.mxu0 0.0
    %1040 = vmatpush1.msra.mxu0 0.0
    %1041 = vmatprep.subr.mxu0 0.0
    %1042 = vmatpush1.msra.mxu0 0.0
    %1043 = vmatprep.subr.mxu0 0.0
    %1044 = vmatpush1.msra.mxu0 0.0
    %1045 = vmatprep.subr.mxu0 0.0
    %1046 = vmatpush1.msra.mxu0 0.0
    %1047 = vmatprep.subr.mxu0 0.0
    %1048 = vmatpush1.msra.mxu0 0.0
    %1049 = vmatprep.subr.mxu0 0.0
    %1050 = vmatpush1.msra.mxu0 0.0
    %1051 = vmatprep.subr.mxu0 0.0
    %1052 = vmatpush1.msra.mxu0 0.0
    %1053 = vmatprep.subr.mxu0 0.0
    %1054 = vmatpush1.msra.mxu0 0.0
    %1055 = vmatprep.subr.mxu0 0.0
    %1056 = vmatpush1.msra.mxu0 0.0
    %1057 = vmatprep.subr.mxu0 0.0
    %1058 = vmatpush1.msra.mxu0 0.0
    %1059 = vmatprep.subr.mxu0 0.0
    %1060 = vmatpush1.msra.mxu0 0.0
    %1061 = vmatprep.subr.mxu0 0.0
    %1062 = vmatpush1.msra.mxu0 0.0
    %1063 = vmatprep.subr.mxu0 0.0
    %1064 = vmatpush1.msra.mxu0 0.0
    %1065 = vmatprep.subr.mxu0 0.0
    %1066 = vmatpush1.msra.mxu0 0.0
    %1067 = vmatprep.subr.mxu0 0.0
    %1068 = vmatpush1.msra.mxu0 0.0
    %1069 = vmatprep.subr.mxu0 0.0
    %1070 = vmatpush1.msra.mxu0 0.0
    %1071 = vmatprep.subr.mxu0 0.0
    %1072 = vmatpush1.msra.mxu0 0.0
    %1073 = vmatprep.subr.mxu0 0.0
    %1074 = vmatpush1.msra.mxu0 0.0
    %1075 = vmatprep.mubr.f32.mxu0 0.0
    %1076 = vmatmul.mubr.f32.gmra.mrb[0].mxu0 %v1000
    %v1077 = vpop.f32.mrb[0].mxu0
    %v1078 = vadd.f32 %v981, %v1077
    %v1079 = vpop.f32.mrb[0].mxu0
    %1080 = vmatprep.mubr.f32.mxu0 0.0
    %1081 = vmatmul.mubr.f32.gmra.mrb[0].mxu0 %v1003
    %v1082 = vpop.f32.mrb[0].mxu0
    %v1083 = vadd.f32 %v986, %v1082
    %v1084 = vpop.f32.mrb[0].mxu0
    %1085 = vmatprep.mubr.f32.mxu0 0.0
    %1086 = vmatmul.mubr.f32.gmra.mrb[0].mxu0 %v1006
    %v1087 = vpop.f32.mrb[0].mxu0
    %v1088 = vadd.f32 %v991, %v1087
    %v1089 = vpop.f32.mrb[0].mxu0
    %1090 = vmatprep.mubr.f32.mxu0 0.0
    %1091 = vmatmul.mubr.f32.gmra.mrb[0].mxu0 %v1009
    %v1092 = vpop.f32.mrb[0].mxu0
    %v1093 = vadd.f32 %v996, %v1092
    %v1094 = vpop.f32.mrb[0].mxu0
    %1095 = vdwg.mxu0
    %s1096 = scalar_lea.vmem %s5, 64
    %v1097 = vld [vmem:[%s1096] sm:$0xff]
    %v1098 = vld [vmem:[%s1096 + $0x8] sm:$0xff]
    %v1099 = vld [vmem:[%s1096 + $0x10] sm:$0xff]
    %v1100 = vld [vmem:[%s1096 + $0x18] sm:$0xff]
    %1101 = vrot.lane.b32.xlu0 %v872, 112
    %v1102 = vpop.permute.xlu0 %1101
    %1103 = vrot.lane.b32.xlu0 %v873, 112
    %v1104 = vpop.permute.xlu0 %1103
    %1105 = vrot.lane.b32.xlu0 %v874, 112
    %v1106 = vpop.permute.xlu0 %1105
    %1107 = vrot.lane.b32.xlu0 %v875, 112
    %v1108 = vpop.permute.xlu0 %1107
    %v1114 = vsel %vm901, %v1097, 0
    %v1117 = vsel %vm901, %v1098, 0
    %v1120 = vsel %vm901, %v1099, 0
    %v1123 = vsel %vm901, %v1100, 0
    %1125 = vmatprep.subr.mxu0 0.0
    %1126 = vmatpush1.msra.mxu0 %v1102
    %1127 = vmatprep.subr.mxu0 0.0
    %1128 = vmatpush1.msra.mxu0 %v1104
    %1129 = vmatprep.subr.mxu0 0.0
    %1130 = vmatpush1.msra.mxu0 %v1106
    %1131 = vmatprep.subr.mxu0 0.0
    %1132 = vmatpush1.msra.mxu0 %v1108
    %1133 = vmatprep.subr.mxu0 0.0
    %1134 = vmatpush1.msra.mxu0 0.0
    %1135 = vmatprep.subr.mxu0 0.0
    %1136 = vmatpush1.msra.mxu0 0.0
    %1137 = vmatprep.subr.mxu0 0.0
    %1138 = vmatpush1.msra.mxu0 0.0
    %1139 = vmatprep.subr.mxu0 0.0
    %1140 = vmatpush1.msra.mxu0 0.0
    %1141 = vmatprep.subr.mxu0 0.0
    %1142 = vmatpush1.msra.mxu0 0.0
    %1143 = vmatprep.subr.mxu0 0.0
    %1144 = vmatpush1.msra.mxu0 0.0
    %1145 = vmatprep.subr.mxu0 0.0
    %1146 = vmatpush1.msra.mxu0 0.0
    %1147 = vmatprep.subr.mxu0 0.0
    %1148 = vmatpush1.msra.mxu0 0.0
    %1149 = vmatprep.subr.mxu0 0.0
    %1150 = vmatpush1.msra.mxu0 0.0
    %1151 = vmatprep.subr.mxu0 0.0
    %1152 = vmatpush1.msra.mxu0 0.0
    %1153 = vmatprep.subr.mxu0 0.0
    %1154 = vmatpush1.msra.mxu0 0.0
    %1155 = vmatprep.subr.mxu0 0.0
    %1156 = vmatpush1.msra.mxu0 0.0
    %1157 = vmatprep.subr.mxu0 0.0
    %1158 = vmatpush1.msra.mxu0 0.0
    %1159 = vmatprep.subr.mxu0 0.0
    %1160 = vmatpush1.msra.mxu0 0.0
    %1161 = vmatprep.subr.mxu0 0.0
    %1162 = vmatpush1.msra.mxu0 0.0
    %1163 = vmatprep.subr.mxu0 0.0
    %1164 = vmatpush1.msra.mxu0 0.0
    %1165 = vmatprep.subr.mxu0 0.0
    %1166 = vmatpush1.msra.mxu0 0.0
    %1167 = vmatprep.subr.mxu0 0.0
    %1168 = vmatpush1.msra.mxu0 0.0
    %1169 = vmatprep.subr.mxu0 0.0
    %1170 = vmatpush1.msra.mxu0 0.0
    %1171 = vmatprep.subr.mxu0 0.0
    %1172 = vmatpush1.msra.mxu0 0.0
    %1173 = vmatprep.subr.mxu0 0.0
    %1174 = vmatpush1.msra.mxu0 0.0
    %1175 = vmatprep.subr.mxu0 0.0
    %1176 = vmatpush1.msra.mxu0 0.0
    %1177 = vmatprep.subr.mxu0 0.0
    %1178 = vmatpush1.msra.mxu0 0.0
    %1179 = vmatprep.subr.mxu0 0.0
    %1180 = vmatpush1.msra.mxu0 0.0
    %1181 = vmatprep.subr.mxu0 0.0
    %1182 = vmatpush1.msra.mxu0 0.0
    %1183 = vmatprep.subr.mxu0 0.0
    %1184 = vmatpush1.msra.mxu0 0.0
    %1185 = vmatprep.subr.mxu0 0.0
    %1186 = vmatpush1.msra.mxu0 0.0
    %1187 = vmatprep.subr.mxu0 0.0
    %1188 = vmatpush1.msra.mxu0 0.0
    %1189 = vmatprep.mubr.f32.mxu0 0.0
    %1190 = vmatmul.mubr.f32.gmra.mrb[0].mxu0 %v1114
    %v1191 = vpop.f32.mrb[0].mxu0
    %v1192 = vadd.f32 0.0, %v1191
    %v1193 = vpop.f32.mrb[0].mxu0
    %1194 = vmatprep.mubr.f32.mxu0 0.0
    %1195 = vmatmul.mubr.f32.gmra.mrb[0].mxu0 %v1117
    %v1196 = vpop.f32.mrb[0].mxu0
    %v1197 = vadd.f32 0.0, %v1196
    %v1198 = vpop.f32.mrb[0].mxu0
    %1199 = vmatprep.mubr.f32.mxu0 0.0
    %1200 = vmatmul.mubr.f32.gmra.mrb[0].mxu0 %v1120
    %v1201 = vpop.f32.mrb[0].mxu0
    %v1202 = vadd.f32 0.0, %v1201
    %v1203 = vpop.f32.mrb[0].mxu0
    %1204 = vmatprep.mubr.f32.mxu0 0.0
    %1205 = vmatmul.mubr.f32.gmra.mrb[0].mxu0 %v1123
    %v1206 = vpop.f32.mrb[0].mxu0
    %v1207 = vadd.f32 0.0, %v1206
    %v1208 = vpop.f32.mrb[0].mxu0
    %1209 = vdwg.mxu0
    %v1210 = vadd.f32 %v1078, %v1192
    %v1211 = vadd.f32 %v1083, %v1197
    %v1212 = vadd.f32 %v1088, %v1202
    %v1213 = vadd.f32 %v1093, %v1207
    %s1214 = scalar_lea.vmem %s5, 96
    %v1215 = vld [vmem:[%s1214] sm:$0xff]
    %v1216 = vld [vmem:[%s1214 + $0x8] sm:$0xff]
    %v1217 = vld [vmem:[%s1214 + $0x10] sm:$0xff]
    %v1218 = vld [vmem:[%s1214 + $0x18] sm:$0xff]
    %1219 = vrot.lane.b32.xlu0 %v872, 104
    %v1220 = vpop.permute.xlu0 %1219
    %1221 = vrot.lane.b32.xlu0 %v873, 104
    %v1222 = vpop.permute.xlu0 %1221
    %1223 = vrot.lane.b32.xlu0 %v874, 104
    %v1224 = vpop.permute.xlu0 %1223
    %1225 = vrot.lane.b32.xlu0 %v875, 104
    %v1226 = vpop.permute.xlu0 %1225
    %v1232 = vsel %vm901, %v1215, 0
    %v1235 = vsel %vm901, %v1216, 0
    %v1238 = vsel %vm901, %v1217, 0
    %v1241 = vsel %vm901, %v1218, 0
    %1243 = vmatprep.subr.mxu0 0.0
    %1244 = vmatpush1.msra.mxu0 %v1220
    %1245 = vmatprep.subr.mxu0 0.0
    %1246 = vmatpush1.msra.mxu0 %v1222
    %1247 = vmatprep.subr.mxu0 0.0
    %1248 = vmatpush1.msra.mxu0 %v1224
    %1249 = vmatprep.subr.mxu0 0.0
    %1250 = vmatpush1.msra.mxu0 %v1226
    %1251 = vmatprep.subr.mxu0 0.0
    %1252 = vmatpush1.msra.mxu0 0.0
    %1253 = vmatprep.subr.mxu0 0.0
    %1254 = vmatpush1.msra.mxu0 0.0
    %1255 = vmatprep.subr.mxu0 0.0
    %1256 = vmatpush1.msra.mxu0 0.0
    %1257 = vmatprep.subr.mxu0 0.0
    %1258 = vmatpush1.msra.mxu0 0.0
    %1259 = vmatprep.subr.mxu0 0.0
    %1260 = vmatpush1.msra.mxu0 0.0
    %1261 = vmatprep.subr.mxu0 0.0
    %1262 = vmatpush1.msra.mxu0 0.0
    %1263 = vmatprep.subr.mxu0 0.0
    %1264 = vmatpush1.msra.mxu0 0.0
    %1265 = vmatprep.subr.mxu0 0.0
    %1266 = vmatpush1.msra.mxu0 0.0
    %1267 = vmatprep.subr.mxu0 0.0
    %1268 = vmatpush1.msra.mxu0 0.0
    %1269 = vmatprep.subr.mxu0 0.0
    %1270 = vmatpush1.msra.mxu0 0.0
    %1271 = vmatprep.subr.mxu0 0.0
    %1272 = vmatpush1.msra.mxu0 0.0
    %1273 = vmatprep.subr.mxu0 0.0
    %1274 = vmatpush1.msra.mxu0 0.0
    %1275 = vmatprep.subr.mxu0 0.0
    %1276 = vmatpush1.msra.mxu0 0.0
    %1277 = vmatprep.subr.mxu0 0.0
    %1278 = vmatpush1.msra.mxu0 0.0
    %1279 = vmatprep.subr.mxu0 0.0
    %1280 = vmatpush1.msra.mxu0 0.0
    %1281 = vmatprep.subr.mxu0 0.0
    %1282 = vmatpush1.msra.mxu0 0.0
    %1283 = vmatprep.subr.mxu0 0.0
    %1284 = vmatpush1.msra.mxu0 0.0
    %1285 = vmatprep.subr.mxu0 0.0
    %1286 = vmatpush1.msra.mxu0 0.0
    %1287 = vmatprep.subr.mxu0 0.0
    %1288 = vmatpush1.msra.mxu0 0.0
    %1289 = vmatprep.subr.mxu0 0.0
    %1290 = vmatpush1.msra.mxu0 0.0
    %1291 = vmatprep.subr.mxu0 0.0
    %1292 = vmatpush1.msra.mxu0 0.0
    %1293 = vmatprep.subr.mxu0 0.0
    %1294 = vmatpush1.msra.mxu0 0.0
    %1295 = vmatprep.subr.mxu0 0.0
    %1296 = vmatpush1.msra.mxu0 0.0
    %1297 = vmatprep.subr.mxu0 0.0
    %1298 = vmatpush1.msra.mxu0 0.0
    %1299 = vmatprep.subr.mxu0 0.0
    %1300 = vmatpush1.msra.mxu0 0.0
    %1301 = vmatprep.subr.mxu0 0.0
    %1302 = vmatpush1.msra.mxu0 0.0
    %1303 = vmatprep.subr.mxu0 0.0
    %1304 = vmatpush1.msra.mxu0 0.0
    %1305 = vmatprep.subr.mxu0 0.0
    %1306 = vmatpush1.msra.mxu0 0.0
    %1307 = vmatprep.mubr.f32.mxu0 0.0
    %1308 = vmatmul.mubr.f32.gmra.mrb[0].mxu0 %v1232
    %v1309 = vpop.f32.mrb[0].mxu0
    %v1310 = vadd.f32 0.0, %v1309
    %v1311 = vpop.f32.mrb[0].mxu0
    %1312 = vmatprep.mubr.f32.mxu0 0.0
    %1313 = vmatmul.mubr.f32.gmra.mrb[0].mxu0 %v1235
    %v1314 = vpop.f32.mrb[0].mxu0
    %v1315 = vadd.f32 0.0, %v1314
    %v1316 = vpop.f32.mrb[0].mxu0
    %1317 = vmatprep.mubr.f32.mxu0 0.0
    %1318 = vmatmul.mubr.f32.gmra.mrb[0].mxu0 %v1238
    %v1319 = vpop.f32.mrb[0].mxu0
    %v1320 = vadd.f32 0.0, %v1319
    %v1321 = vpop.f32.mrb[0].mxu0
    %1322 = vmatprep.mubr.f32.mxu0 0.0
    %1323 = vmatmul.mubr.f32.gmra.mrb[0].mxu0 %v1241
    %v1324 = vpop.f32.mrb[0].mxu0
    %v1325 = vadd.f32 0.0, %v1324
    %v1326 = vpop.f32.mrb[0].mxu0
    %1327 = vdwg.mxu0
    %v1328 = vadd.f32 %v1210, %v1310
    %v1329 = vadd.f32 %v1211, %v1315
    %v1330 = vadd.f32 %v1212, %v1320
    %v1331 = vadd.f32 %v1213, %v1325
    %v1332 = vld [vmem:[%s6] sm:$0xff]
    %v1333 = vld [vmem:[%s6 + $0x8] sm:$0xff]
    %v1334 = vld [vmem:[%s6 + $0x10] sm:$0xff]
    %v1335 = vld [vmem:[%s6 + $0x18] sm:$0xff]
    %1337 = vset.pattern.permute.xlu0 0
    %1338 = vperm.xlu0 %1337, %v1332
    %v1339 = vpop.permute.xlu0 %1338
    %1342 = vset.pattern.permute.xlu0 0
    %1343 = vperm.xlu0 %1342, %v1333
    %v1344 = vpop.permute.xlu0 %1343
    %1347 = vset.pattern.permute.xlu0 0
    %1348 = vperm.xlu0 %1347, %v1334
    %v1349 = vpop.permute.xlu0 %1348
    %1352 = vset.pattern.permute.xlu0 0
    %1353 = vperm.xlu0 %1352, %v1335
    %v1354 = vpop.permute.xlu0 %1353
    %v1356 = vadd.f32 %v1328, %v1339
    %v1357 = vadd.f32 %v1329, %v1344
    %v1358 = vadd.f32 %v1330, %v1349
    %v1359 = vadd.f32 %v1331, %v1354
    %vm1360 = vcmp.gt.f32.partialorder %v1356, 0.0
    %vm1361 = vcmp.gt.f32.partialorder %v1357, 0.0
    %vm1362 = vcmp.gt.f32.partialorder %v1358, 0.0
    %vm1363 = vcmp.gt.f32.partialorder %v1359, 0.0
    %v1364 = vmul.f32 %v1356, 0.01
    %v1365 = vmul.f32 %v1357, 0.01
    %v1366 = vmul.f32 %v1358, 0.01
    %v1367 = vmul.f32 %v1359, 0.01
    %v1368 = vsel %vm1360, %v1356, %v1364
    %v1369 = vsel %vm1361, %v1357, %v1365
    %v1370 = vsel %vm1362, %v1358, %v1366
    %v1371 = vsel %vm1363, %v1359, %v1367
    %v1372 = vld [vmem:[%s7] sm:$0xf]
    %v1373 = vld [vmem:[%s8] sm:$0xf]
    %1375 = vset.pattern.permute.xlu0 0
    %1376 = vperm.xlu0 %1375, %v1373
    %v1377 = vpop.permute.xlu0 %1376
    %v1380 = vsel %vm901, %v1372, 0
    %1382 = vmatprep.subr.mxu0 0.0
    %1383 = vmatpush1.msra.mxu0 %v1368
    %1384 = vmatprep.subr.mxu0 0.0
    %1385 = vmatpush1.msra.mxu0 %v1369
    %1386 = vmatprep.subr.mxu0 0.0
    %1387 = vmatpush1.msra.mxu0 %v1370
    %1388 = vmatprep.subr.mxu0 0.0
    %1389 = vmatpush1.msra.mxu0 %v1371
    %1390 = vmatprep.subr.mxu0 0.0
    %1391 = vmatpush1.msra.mxu0 0.0
    %1392 = vmatprep.subr.mxu0 0.0
    %1393 = vmatpush1.msra.mxu0 0.0
    %1394 = vmatprep.subr.mxu0 0.0
    %1395 = vmatpush1.msra.mxu0 0.0
    %1396 = vmatprep.subr.mxu0 0.0
    %1397 = vmatpush1.msra.mxu0 0.0
    %1398 = vmatprep.subr.mxu0 0.0
    %1399 = vmatpush1.msra.mxu0 0.0
    %1400 = vmatprep.subr.mxu0 0.0
    %1401 = vmatpush1.msra.mxu0 0.0
    %1402 = vmatprep.subr.mxu0 0.0
    %1403 = vmatpush1.msra.mxu0 0.0
    %1404 = vmatprep.subr.mxu0 0.0
    %1405 = vmatpush1.msra.mxu0 0.0
    %1406 = vmatprep.subr.mxu0 0.0
    %1407 = vmatpush1.msra.mxu0 0.0
    %1408 = vmatprep.subr.mxu0 0.0
    %1409 = vmatpush1.msra.mxu0 0.0
    %1410 = vmatprep.subr.mxu0 0.0
    %1411 = vmatpush1.msra.mxu0 0.0
    %1412 = vmatprep.subr.mxu0 0.0
    %1413 = vmatpush1.msra.mxu0 0.0
    %1414 = vmatprep.subr.mxu0 0.0
    %1415 = vmatpush1.msra.mxu0 0.0
    %1416 = vmatprep.subr.mxu0 0.0
    %1417 = vmatpush1.msra.mxu0 0.0
    %1418 = vmatprep.subr.mxu0 0.0
    %1419 = vmatpush1.msra.mxu0 0.0
    %1420 = vmatprep.subr.mxu0 0.0
    %1421 = vmatpush1.msra.mxu0 0.0
    %1422 = vmatprep.subr.mxu0 0.0
    %1423 = vmatpush1.msra.mxu0 0.0
    %1424 = vmatprep.subr.mxu0 0.0
    %1425 = vmatpush1.msra.mxu0 0.0
    %1426 = vmatprep.subr.mxu0 0.0
    %1427 = vmatpush1.msra.mxu0 0.0
    %1428 = vmatprep.subr.mxu0 0.0
    %1429 = vmatpush1.msra.mxu0 0.0
    %1430 = vmatprep.subr.mxu0 0.0
    %1431 = vmatpush1.msra.mxu0 0.0
    %1432 = vmatprep.subr.mxu0 0.0
    %1433 = vmatpush1.msra.mxu0 0.0
    %1434 = vmatprep.subr.mxu0 0.0
    %1435 = vmatpush1.msra.mxu0 0.0
    %1436 = vmatprep.subr.mxu0 0.0
    %1437 = vmatpush1.msra.mxu0 0.0
    %1438 = vmatprep.subr.mxu0 0.0
    %1439 = vmatpush1.msra.mxu0 0.0
    %1440 = vmatprep.subr.mxu0 0.0
    %1441 = vmatpush1.msra.mxu0 0.0
    %1442 = vmatprep.subr.mxu0 0.0
    %1443 = vmatpush1.msra.mxu0 0.0
    %1444 = vmatprep.subr.mxu0 0.0
    %1445 = vmatpush1.msra.mxu0 0.0
    %1446 = vmatprep.mubr.f32.mxu0 0.0
    %1447 = vmatmul.mubr.f32.gmra.mrb[0].mxu0 %v1380
    %v1448 = vpop.f32.mrb[0].mxu0
    %v1449 = vadd.f32 %v1377, %v1448
    %v1450 = vpop.f32.mrb[0].mxu0
    %1451 = vdwg.mxu0
    %vm1452 = vcmask 60416
    %1453 = vst.msk [vmem:[#allocation4] sm:$0xf] %vm1452, %v1449
    // Predicated region
    $region38: #{tpu_custom_call.1} parent=1 // pred_check
      _
    $region39: #{tpu_custom_call.1} parent=1 // pred_check_branch
      %1455 = sbr.rel (0) target = $region41
    $region40: #{tpu_custom_call.1} parent=1 // pred_region
      %s1457 = ssub.s32 64, 64
      %1458 = vsyncadd [#allocation5], %s1457
      %s1460 = sshll.u32 [#allocation4], 4
      %s1461 = int_to_ptr.vmem [resolvable:$true] %s1460
      %1463 = dma.vmem_to_hbm [thread:$0]  %s1461, 64, %s9, [#allocation5]
    $region41: #{tpu_custom_call.1} parent=1 // pred_fallthru
      _
    // Predicated region
    $region42: #{tpu_custom_call.1} parent=1 // pred_check
      _
    $region43: #{tpu_custom_call.1} parent=1 // pred_check_branch
      %1465 = sbr.rel (0) target = $region45
    $region44: #{tpu_custom_call.1} parent=1 // pred_region
      %1466 = dma.done [#allocation5], 64
    $region45: #{tpu_custom_call.1} parent=1 // pred_fallthru
      _
    %1467 = vsyncpa [#allocation5], 1

</llo_original>
